<compile_context>
chip_gen: v7x
topology: tpu7x:2x2x1
jax: 0.10.0
libtpu: 0.0.40
codegen_flags: <defaults>
</compile_context>

<pallas_src>
import functools

import jax
import jax.numpy as jnp
from jax.experimental import pallas as pl
from jax.experimental.pallas import tpu as pltpu

LANE = 128
ROW_ALIGN = 16          # multiple of 8 (fp32) and 16 (bf16) sublane tiles
N_CLASSES = 10
HIDDEN = (512, 256, 64)


def _round_up(x, m):
    return (x + m - 1) // m * m


def _cdiv(a, b):
    return (a + b - 1) // b


# ---------------------------------------------------------------------------
# Kernel: one batch tile of the fused 4-layer MLP.
# ---------------------------------------------------------------------------
def _mlp_kernel(x_ref, w1_ref, b1_ref, w2_ref, b2_ref,
                w3_ref, b3_ref, w4_ref, b4_ref, out_ref):
    # fp32 input tile -> bf16 in-kernel; fp32 accumulation on the MXU.
    x = x_ref[...].astype(jnp.bfloat16)

    h = jnp.dot(x, w1_ref[...], preferred_element_type=jnp.float32) + b1_ref[...]
    h = jnp.maximum(h, 0.0).astype(jnp.bfloat16)

    h = jnp.dot(h, w2_ref[...], preferred_element_type=jnp.float32) + b2_ref[...]
    h = jnp.maximum(h, 0.0).astype(jnp.bfloat16)

    h = jnp.dot(h, w3_ref[...], preferred_element_type=jnp.float32) + b3_ref[...]
    h = jnp.maximum(h, 0.0).astype(jnp.bfloat16)

    out = jnp.dot(h, w4_ref[...], preferred_element_type=jnp.float32) + b4_ref[...]
    out_ref[...] = out.astype(out_ref.dtype)        # bf16, lane-dense store


# ---------------------------------------------------------------------------
# One-time parameter preparation (hoisted out of the per-call path).
# ---------------------------------------------------------------------------
def prepare_params(params):
    """Lane-pad fc3/fc4 to 128, cast weights to bf16 and biases to fp32.

    Zero padding keeps the live columns bit-identical: padded b3 columns are 0,
    ReLU keeps them 0, padded w4 rows therefore multiply zeros, and padded w4/b4
    columns produce 0 logits that are sliced away after the call.
    Call once and reuse the result across forward calls.
    """
    (w1, b1), (w2, b2), (w3, b3), (w4, b4) = params
    d3p = _round_up(w3.shape[1], LANE)          # 64  -> 128
    d4p = _round_up(w4.shape[1], LANE)          # 10  -> 128
    w3p = jnp.zeros((w3.shape[0], d3p), w3.dtype).at[:, :w3.shape[1]].set(w3)
    b3p = jnp.zeros((1, d3p), b3.dtype).at[:, :b3.shape[1]].set(b3)
    w4p = jnp.zeros((d3p, d4p), w4.dtype).at[:w4.shape[0], :w4.shape[1]].set(w4)
    b4p = jnp.zeros((1, d4p), b4.dtype).at[:, :b4.shape[1]].set(b4)

    ws = tuple(w.astype(jnp.bfloat16) for w in (w1, w2, w3p, w4p))
    bs = tuple(b.astype(jnp.float32) for b in (b1, b2, b3p, b4p))
    return ws, bs


def _choose_tile(B, batch_tile):
    """Row tile that respects batch_tile, minimizes padded rows and gives at
    least 2 grid steps when B allows (so v7x can use both TensorCores)."""
    n = max(1, _cdiv(B, batch_tile))
    if n < 2 and B >= 2 * ROW_ALIGN:
        n = 2
    tm = _round_up(_cdiv(B, n), ROW_ALIGN)
    return tm, _cdiv(B, tm)


# ---------------------------------------------------------------------------
# Forward pass.
# ---------------------------------------------------------------------------
@functools.partial(jax.jit, static_argnames=("batch_tile",))
def genre_classifier_forward(x, prepped_params, *, batch_tile=512):
    """x: (B, ...) float32. prepped_params: output of prepare_params()."""
    ws, bs = prepped_params
    w1, w2, w3, w4 = ws
    b1, b2, b3, b4 = bs

    B = x.shape[0]
    x2d = x.reshape(B, -1)                       # fp32; no cast / pad here
    F = x2d.shape[1]
    assert F == w1.shape[0], (F, w1.shape)
    d1, d2, d3, d4p = w1.shape[1], w2.shape[1], w3.shape[1], w4.shape[1]

    tm, nsteps = _choose_tile(B, batch_tile)

    resident = lambda i: (0, 0)                  # weights/biases: same block always

    def res_spec(a):
        return pl.BlockSpec(a.shape, resident, pipeline_mode=pl.Buffered(1))

    flops = 2 * B * (F * d1 + d1 * d2 + d2 * d3 + d3 * d4p)
    bytes_accessed = (
        int(x2d.size) * 4 + B * d4p * 2
        + sum(int(w.size) * 2 for w in ws)
        + sum(int(b.size) * 4 for b in bs))

    out = pl.pallas_call(
        _mlp_kernel,
        out_shape=jax.ShapeDtypeStruct((B, d4p), jnp.bfloat16),
        grid=(nsteps,),
        in_specs=[
            pl.BlockSpec((tm, F), lambda i: (i, 0)),   # batch-tiled fp32 input
            res_spec(w1), res_spec(b1),
            res_spec(w2), res_spec(b2),
            res_spec(w3), res_spec(b3),
            res_spec(w4), res_spec(b4),
        ],
        out_specs=pl.BlockSpec((tm, d4p), lambda i: (i, 0)),   # lane-dense output
        compiler_params=pltpu.CompilerParams(
            dimension_semantics=("parallel",),    # batch axis -> both TCs on v7x
            vmem_limit_bytes=32 * 1024 * 1024,    # ample for ~5 MiB footprint
        ),
        cost_estimate=pl.CostEstimate(
            flops=flops, transcendentals=0, bytes_accessed=bytes_accessed),
    )(x2d, w1, b1, w2, b2, w3, b3, w4, b4)

    # Slice the live 10 classes and upcast logits to fp32.
    return out[:, :N_CLASSES].astype(jnp.float32)


# ---------------------------------------------------------------------------
# Parameter init (nn.Linear-style) and a pure-JAX numerical reference.
# ---------------------------------------------------------------------------
def init_params(key, input_features):
    """Weights stored (in, out), biases (1, out)."""
    dims = [input_features, *HIDDEN, N_CLASSES]
    params = []
    for i in range(4):
        key, kw, kb = jax.random.split(key, 3)
        bound = 1.0 / jnp.sqrt(dims[i])
        w = jax.random.uniform(kw, (dims[i], dims[i + 1]),
                               minval=-bound, maxval=bound, dtype=jnp.float32)
        b = jax.random.uniform(kb, (1, dims[i + 1]),
                               minval=-bound, maxval=bound, dtype=jnp.float32)
        params.append((w, b))
    return params


def _reference_forward(x, params):
    """Pure-JAX reference mirroring the kernel numerics (bf16 weights/activations,
    fp32 MXU accumulation, bf16 output store)."""
    B = x.shape[0]
    h = x.reshape(B, -1).astype(jnp.bfloat16)
    (w1, b1), (w2, b2), (w3, b3), (w4, b4) = params
    layers = ((w1, b1, True), (w2, b2, True), (w3, b3, True), (w4, b4, False))
    for w, b, relu in layers:
        a = jnp.dot(h, w.astype(jnp.bfloat16),
                    preferred_element_type=jnp.float32) + b.astype(jnp.float32)
        h = jnp.maximum(a, 0.0).astype(jnp.bfloat16) if relu else a.astype(jnp.bfloat16)
    return h.astype(jnp.float32)


if __name__ == "__main__":
    key = jax.random.PRNGKey(0)
    k_x, k_p = jax.random.split(key)

    # MFCC-like input: batch=2, 13 coefficients x 32 frames -> 416 features.
    B, H, W = 2, 13, 32
    input_features = H * W
    x = jax.random.normal(k_x, (B, H, W), dtype=jnp.float32)
    params = init_params(k_p, input_features)

    prepped = prepare_params(params)          # one-time prep; reuse across calls

    out = genre_classifier_forward(x, prepped)
    out = jax.block_until_ready(out)

    ref = _reference_forward(x, params)
    assert out.shape == (B, N_CLASSES), out.shape
    assert jnp.allclose(out, ref, atol=2e-2, rtol=2e-2), (
        float(jnp.max(jnp.abs(out - ref))))

    print("KERNEL_OK")
</pallas_src>

<mosaic_0001>
module attributes {stable_mosaic.version = 11 : i64} {
  func.func @_mlp_kernel(%arg0: i32, %arg1: memref<16x416xf32, #tpu.memory_space<vmem>>, %arg2: memref<416x512xbf16, #tpu.memory_space<vmem>>, %arg3: memref<1x512xf32, #tpu.memory_space<vmem>>, %arg4: memref<512x256xbf16, #tpu.memory_space<vmem>>, %arg5: memref<1x256xf32, #tpu.memory_space<vmem>>, %arg6: memref<256x128xbf16, #tpu.memory_space<vmem>>, %arg7: memref<1x128xf32, #tpu.memory_space<vmem>>, %arg8: memref<128x128xbf16, #tpu.memory_space<vmem>>, %arg9: memref<1x128xf32, #tpu.memory_space<vmem>>, %arg10: memref<16x128xbf16, #tpu.memory_space<vmem>>) attributes {dimension_semantics = [#tpu.dimension_semantics<parallel>], iteration_bounds = array<i64: 1>, scalar_prefetch = 0 : i64, scratch_operands = 0 : i64, tpu.core_type = #tpu.core_type<tc>, window_params = [{transform_indices = @transform_0, window_bounds = array<i64: 16, 416>}, {pipeline_mode = #tpu.pipeline_mode<synchronous>, transform_indices = @transform_1, window_bounds = array<i64: 416, 512>}, {pipeline_mode = #tpu.pipeline_mode<synchronous>, transform_indices = @transform_2, window_bounds = array<i64: 1, 512>}, {pipeline_mode = #tpu.pipeline_mode<synchronous>, transform_indices = @transform_3, window_bounds = array<i64: 512, 256>}, {pipeline_mode = #tpu.pipeline_mode<synchronous>, transform_indices = @transform_4, window_bounds = array<i64: 1, 256>}, {pipeline_mode = #tpu.pipeline_mode<synchronous>, transform_indices = @transform_5, window_bounds = array<i64: 256, 128>}, {pipeline_mode = #tpu.pipeline_mode<synchronous>, transform_indices = @transform_6, window_bounds = array<i64: 1, 128>}, {pipeline_mode = #tpu.pipeline_mode<synchronous>, transform_indices = @transform_7, window_bounds = array<i64: 128, 128>}, {pipeline_mode = #tpu.pipeline_mode<synchronous>, transform_indices = @transform_8, window_bounds = array<i64: 1, 128>}, {transform_indices = @transform_9, window_bounds = array<i64: 16, 128>}]} {
    %c0 = arith.constant 0 : index
    %c0_0 = arith.constant 0 : index
    %0 = vector.load %arg1[%c0, %c0_0] : memref<16x416xf32, #tpu.memory_space<vmem>>, vector<16x416xf32>
    %1 = arith.truncf %0 : vector<16x416xf32> to vector<16x416xbf16>
    %c0_1 = arith.constant 0 : index
    %c0_2 = arith.constant 0 : index
    %2 = vector.load %arg2[%c0_1, %c0_2] : memref<416x512xbf16, #tpu.memory_space<vmem>>, vector<416x512xbf16>
    %cst = arith.constant dense<0.000000e+00> : vector<16x512xf32>
    %3 = tpu.matmul %1, %2, %cst {dimension_numbers = #tpu.dot_dimension_numbers<[1], [0], [0], [1], [0, 0, 1, 1], [], []>} : vector<16x416xbf16>, vector<416x512xbf16>, vector<16x512xf32> -> vector<16x512xf32>
    %c0_3 = arith.constant 0 : index
    %c0_4 = arith.constant 0 : index
    %4 = vector.load %arg3[%c0_3, %c0_4] : memref<1x512xf32, #tpu.memory_space<vmem>>, vector<1x512xf32>
    %5 = vector.broadcast %4 : vector<1x512xf32> to vector<16x512xf32>
    %6 = arith.addf %3, %5 : vector<16x512xf32>
    %cst_5 = arith.constant 0.000000e+00 : f32
    %7 = vector.broadcast %cst_5 : f32 to vector<16x512xf32>
    %8 = arith.maximumf %6, %7 : vector<16x512xf32>
    %9 = arith.truncf %8 : vector<16x512xf32> to vector<16x512xbf16>
    %c0_6 = arith.constant 0 : index
    %c0_7 = arith.constant 0 : index
    %10 = vector.load %arg4[%c0_6, %c0_7] : memref<512x256xbf16, #tpu.memory_space<vmem>>, vector<512x256xbf16>
    %cst_8 = arith.constant dense<0.000000e+00> : vector<16x256xf32>
    %11 = tpu.matmul %9, %10, %cst_8 {dimension_numbers = #tpu.dot_dimension_numbers<[1], [0], [0], [1], [0, 0, 1, 1], [], []>} : vector<16x512xbf16>, vector<512x256xbf16>, vector<16x256xf32> -> vector<16x256xf32>
    %c0_9 = arith.constant 0 : index
    %c0_10 = arith.constant 0 : index
    %12 = vector.load %arg5[%c0_9, %c0_10] : memref<1x256xf32, #tpu.memory_space<vmem>>, vector<1x256xf32>
    %13 = vector.broadcast %12 : vector<1x256xf32> to vector<16x256xf32>
    %14 = arith.addf %11, %13 : vector<16x256xf32>
    %cst_11 = arith.constant 0.000000e+00 : f32
    %15 = vector.broadcast %cst_11 : f32 to vector<16x256xf32>
    %16 = arith.maximumf %14, %15 : vector<16x256xf32>
    %17 = arith.truncf %16 : vector<16x256xf32> to vector<16x256xbf16>
    %c0_12 = arith.constant 0 : index
    %c0_13 = arith.constant 0 : index
    %18 = vector.load %arg6[%c0_12, %c0_13] : memref<256x128xbf16, #tpu.memory_space<vmem>>, vector<256x128xbf16>
    %cst_14 = arith.constant dense<0.000000e+00> : vector<16x128xf32>
    %19 = tpu.matmul %17, %18, %cst_14 {dimension_numbers = #tpu.dot_dimension_numbers<[1], [0], [0], [1], [0, 0, 1, 1], [], []>} : vector<16x256xbf16>, vector<256x128xbf16>, vector<16x128xf32> -> vector<16x128xf32>
    %c0_15 = arith.constant 0 : index
    %c0_16 = arith.constant 0 : index
    %20 = vector.load %arg7[%c0_15, %c0_16] : memref<1x128xf32, #tpu.memory_space<vmem>>, vector<1x128xf32>
    %21 = vector.broadcast %20 : vector<1x128xf32> to vector<16x128xf32>
    %22 = arith.addf %19, %21 : vector<16x128xf32>
    %cst_17 = arith.constant 0.000000e+00 : f32
    %23 = vector.broadcast %cst_17 : f32 to vector<16x128xf32>
    %24 = arith.maximumf %22, %23 : vector<16x128xf32>
    %25 = arith.truncf %24 : vector<16x128xf32> to vector<16x128xbf16>
    %c0_18 = arith.constant 0 : index
    %c0_19 = arith.constant 0 : index
    %26 = vector.load %arg8[%c0_18, %c0_19] : memref<128x128xbf16, #tpu.memory_space<vmem>>, vector<128x128xbf16>
    %cst_20 = arith.constant dense<0.000000e+00> : vector<16x128xf32>
    %27 = tpu.matmul %25, %26, %cst_20 {dimension_numbers = #tpu.dot_dimension_numbers<[1], [0], [0], [1], [0, 0, 1, 1], [], []>} : vector<16x128xbf16>, vector<128x128xbf16>, vector<16x128xf32> -> vector<16x128xf32>
    %c0_21 = arith.constant 0 : index
    %c0_22 = arith.constant 0 : index
    %28 = vector.load %arg9[%c0_21, %c0_22] : memref<1x128xf32, #tpu.memory_space<vmem>>, vector<1x128xf32>
    %29 = vector.broadcast %28 : vector<1x128xf32> to vector<16x128xf32>
    %30 = arith.addf %27, %29 : vector<16x128xf32>
    %31 = arith.truncf %30 : vector<16x128xf32> to vector<16x128xbf16>
    %c0_23 = arith.constant 0 : index
    %c0_24 = arith.constant 0 : index
    %32 = vector.load %arg10[%c0_23, %c0_24] : memref<16x128xbf16, #tpu.memory_space<vmem>>, vector<16x128xbf16>
    tpu.vector_store %arg10[%c0_23, %c0_24], %31 {strides = array<i32>} : memref<16x128xbf16, #tpu.memory_space<vmem>>, vector<16x128xbf16>,
    return
  }
  func.func @transform_0(%arg0: i32) -> (i32, i32) {
    %c0_i32 = arith.constant 0 : i32
    %c0_i32_0 = arith.constant 0 : i32
    return %arg0, %c0_i32 : i32, i32
  }
  func.func @transform_1(%arg0: i32) -> (i32, i32) {
    %c0_i32 = arith.constant 0 : i32
    %c0_i32_0 = arith.constant 0 : i32
    %c0_i32_1 = arith.constant 0 : i32
    return %c0_i32, %c0_i32_0 : i32, i32
  }
  func.func @transform_2(%arg0: i32) -> (i32, i32) {
    %c0_i32 = arith.constant 0 : i32
    %c0_i32_0 = arith.constant 0 : i32
    %c0_i32_1 = arith.constant 0 : i32
    return %c0_i32, %c0_i32_0 : i32, i32
  }
  func.func @transform_3(%arg0: i32) -> (i32, i32) {
    %c0_i32 = arith.constant 0 : i32
    %c0_i32_0 = arith.constant 0 : i32
    %c0_i32_1 = arith.constant 0 : i32
    return %c0_i32, %c0_i32_0 : i32, i32
  }
  func.func @transform_4(%arg0: i32) -> (i32, i32) {
    %c0_i32 = arith.constant 0 : i32
    %c0_i32_0 = arith.constant 0 : i32
    %c0_i32_1 = arith.constant 0 : i32
    return %c0_i32, %c0_i32_0 : i32, i32
  }
  func.func @transform_5(%arg0: i32) -> (i32, i32) {
    %c0_i32 = arith.constant 0 : i32
    %c0_i32_0 = arith.constant 0 : i32
    %c0_i32_1 = arith.constant 0 : i32
    return %c0_i32, %c0_i32_0 : i32, i32
  }
  func.func @transform_6(%arg0: i32) -> (i32, i32) {
    %c0_i32 = arith.constant 0 : i32
    %c0_i32_0 = arith.constant 0 : i32
    %c0_i32_1 = arith.constant 0 : i32
    return %c0_i32, %c0_i32_0 : i32, i32
  }
  func.func @transform_7(%arg0: i32) -> (i32, i32) {
    %c0_i32 = arith.constant 0 : i32
    %c0_i32_0 = arith.constant 0 : i32
    %c0_i32_1 = arith.constant 0 : i32
    return %c0_i32, %c0_i32_0 : i32, i32
  }
  func.func @transform_8(%arg0: i32) -> (i32, i32) {
    %c0_i32 = arith.constant 0 : i32
    %c0_i32_0 = arith.constant 0 : i32
    %c0_i32_1 = arith.constant 0 : i32
    return %c0_i32, %c0_i32_0 : i32, i32
  }
  func.func @transform_9(%arg0: i32) -> (i32, i32) {
    %c0_i32 = arith.constant 0 : i32
    %c0_i32_0 = arith.constant 0 : i32
    return %arg0, %c0_i32 : i32, i32
  }
}

</mosaic_0001>

<llo_original>
// kernel: genre_classifier_forward.1
$region0: #{genre_classifier_forward.1}
  #allocation0 [shape = 'u32[]', space=smem, size = 0x4, offset = 0x4, fixed_abs, tag = 'smem constant byte address 0x4 - core index']
  #allocation1 [shape = 'u32[144,128]{1,0:T(1,128)}', space=vmem, size = 0x12000, scoped, tag = 'internal scratch']
  %s0 = inlined_call_operand.vmem [shape: f32[2,416], index: 0, kind: input, shape index: {}]
  %s1 = inlined_call_operand.hbm [shape: bf16[416,512], index: 1, kind: input, shape index: {}]
  %s2 = inlined_call_operand.vmem [shape: f32[1,512], index: 2, kind: input, shape index: {}]
  %s3 = inlined_call_operand.hbm [shape: bf16[512,256], index: 3, kind: input, shape index: {}]
  %s4 = inlined_call_operand.vmem [shape: f32[1,256], index: 4, kind: input, shape index: {}]
  %s5 = inlined_call_operand.hbm [shape: bf16[256,128], index: 5, kind: input, shape index: {}]
  %s6 = inlined_call_operand.vmem [shape: f32[1,128], index: 6, kind: input, shape index: {}]
  %s7 = inlined_call_operand.vmem [shape: bf16[128,128], index: 7, kind: input, shape index: {}]
  %s8 = inlined_call_operand.vmem [shape: f32[1,128], index: 8, kind: input, shape index: {}]
  %s9 = inlined_call_operand.vmem [shape: bf16[2,128], index: 9, kind: output, shape index: {}]
  %s10 = sld [smem:[#allocation0]]
  $region88: #{genre_classifier_forward.1} parent=0
    _
  %s12 = ssub.s32 1, %s10
  %s13 = scalar_select 0, %s12, %s10
  $region1: #{genre_classifier_forward.1} parent=0
    #allocation2 [shape = 'u8[425984]{0}', space=vmem, size = 0x68000, scoped, tag = 'input window, operand 1, single buffered']
    #allocation3 [shape = 's32[1]{0}', space=sflag, size = 0x4, scoped, tag = 'scoped memory for genre_classifier_forward.1']
    #allocation4 [shape = 'u8[262144]{0}', space=vmem, size = 0x40000, scoped, tag = 'input window, operand 3, single buffered']
    #allocation5 [shape = 's32[1]{0}', space=sflag, size = 0x4, scoped, tag = 'scoped memory for genre_classifier_forward.1']
    #allocation6 [shape = 'u8[65536]{0}', space=vmem, size = 0x10000, scoped, tag = 'input window, operand 5, single buffered']
    #allocation7 [shape = 'u8[4096]{0}', space=vmem, size = 0x1000, scoped, tag = 'output window, operand 0, single buffered']
    %14 = vsyncpa [#allocation3], 0
    %15 = vsyncpa [#allocation5], 0
    // Predicated region
    $region2: #{genre_classifier_forward.1} parent=1 // pred_check
      _
    $region3: #{genre_classifier_forward.1} parent=1 // pred_check_branch
      %17 = sbr.rel (0) target = $region5
    $region4: #{genre_classifier_forward.1} parent=1 // pred_region
      _
    $region5: #{genre_classifier_forward.1} parent=1 // pred_fallthru
      _
    // Predicated region
    $region6: #{genre_classifier_forward.1} parent=1 // pred_check
      _
    $region7: #{genre_classifier_forward.1} parent=1 // pred_check_branch
      %19 = sbr.rel (0) target = $region9
    $region8: #{genre_classifier_forward.1} parent=1 // pred_region
      %s21 = ssub.s32 13312, 13312
      %22 = vsyncadd [#allocation3], %s21
      %s23 = sshll.u32 [#allocation2], 4
      %s24 = int_to_ptr.vmem [resolvable:$true] %s23
      %29 = dma.hbm_to_vmem [thread:$0]  %s1, 13312, %s24, [#allocation3], 256, 256, 16
    $region9: #{genre_classifier_forward.1} parent=1 // pred_fallthru
      _
    // Predicated region
    $region10: #{genre_classifier_forward.1} parent=1 // pred_check
      _
    $region11: #{genre_classifier_forward.1} parent=1 // pred_check_branch
      %31 = sbr.rel (0) target = $region13
    $region12: #{genre_classifier_forward.1} parent=1 // pred_region
      _
    $region13: #{genre_classifier_forward.1} parent=1 // pred_fallthru
      _
    // Predicated region
    $region14: #{genre_classifier_forward.1} parent=1 // pred_check
      _
    $region15: #{genre_classifier_forward.1} parent=1 // pred_check_branch
      %33 = sbr.rel (0) target = $region17
    $region16: #{genre_classifier_forward.1} parent=1 // pred_region
      %s35 = ssub.s32 8192, 8192
      %36 = vsyncadd [#allocation5], %s35
      %s37 = sshll.u32 [#allocation4], 4
      %s38 = int_to_ptr.vmem [resolvable:$true] %s37
      %43 = dma.hbm_to_vmem [thread:$0]  %s3, 8192, %s38, [#allocation5], 128, 128, 8
    $region17: #{genre_classifier_forward.1} parent=1 // pred_fallthru
      _
    // Predicated region
    $region18: #{genre_classifier_forward.1} parent=1 // pred_check
      _
    $region19: #{genre_classifier_forward.1} parent=1 // pred_check_branch
      %45 = sbr.rel (0) target = $region21
    $region20: #{genre_classifier_forward.1} parent=1 // pred_region
      _
    $region21: #{genre_classifier_forward.1} parent=1 // pred_fallthru
      _
    // Predicated region
    $region22: #{genre_classifier_forward.1} parent=1 // pred_check
      _
    $region23: #{genre_classifier_forward.1} parent=1 // pred_check_branch
      %47 = sbr.rel (0) target = $region25
    $region24: #{genre_classifier_forward.1} parent=1 // pred_region
      %s49 = ssub.s32 2048, 2048
      %50 = vsyncadd [#allocation5], %s49
      %s51 = sshll.u32 [#allocation6], 4
      %s52 = int_to_ptr.vmem [resolvable:$true] %s51
      %57 = dma.hbm_to_vmem [thread:$0]  %s5, 2048, %s52, [#allocation5], 64, 64, 4
    $region25: #{genre_classifier_forward.1} parent=1 // pred_fallthru
      _
    // Predicated region
    $region26: #{genre_classifier_forward.1} parent=1 // pred_check
      _
    $region27: #{genre_classifier_forward.1} parent=1 // pred_check_branch
      %59 = sbr.rel (0) target = $region29
    $region28: #{genre_classifier_forward.1} parent=1 // pred_region
      _
    $region29: #{genre_classifier_forward.1} parent=1 // pred_fallthru
      _
    // Predicated region
    $region30: #{genre_classifier_forward.1} parent=1 // pred_check
      _
    $region31: #{genre_classifier_forward.1} parent=1 // pred_check_branch
      %61 = sbr.rel (0) target = $region33
    $region32: #{genre_classifier_forward.1} parent=1 // pred_region
      _
    $region33: #{genre_classifier_forward.1} parent=1 // pred_fallthru
      _
    // Predicated region
    $region34: #{genre_classifier_forward.1} parent=1 // pred_check
      _
    $region35: #{genre_classifier_forward.1} parent=1 // pred_check_branch
      %63 = sbr.rel (0) target = $region37
    $region36: #{genre_classifier_forward.1} parent=1 // pred_region
      _
    $region37: #{genre_classifier_forward.1} parent=1 // pred_fallthru
      _
    // Predicated region
    $region38: #{genre_classifier_forward.1} parent=1 // pred_check
      _
    $region39: #{genre_classifier_forward.1} parent=1 // pred_check_branch
      %65 = sbr.rel (0) target = $region41
    $region40: #{genre_classifier_forward.1} parent=1 // pred_region
      %66 = dma.done [#allocation3], 13312
    $region41: #{genre_classifier_forward.1} parent=1 // pred_fallthru
      _
    // Predicated region
    $region42: #{genre_classifier_forward.1} parent=1 // pred_check
      _
    $region43: #{genre_classifier_forward.1} parent=1 // pred_check_branch
      %68 = sbr.rel (0) target = $region45
    $region44: #{genre_classifier_forward.1} parent=1 // pred_region
      %69 = dma.done [#allocation5], 8192
    $region45: #{genre_classifier_forward.1} parent=1 // pred_fallthru
      _
    // Predicated region
    $region46: #{genre_classifier_forward.1} parent=1 // pred_check
      _
    $region47: #{genre_classifier_forward.1} parent=1 // pred_check_branch
      %71 = sbr.rel (0) target = $region49
    $region48: #{genre_classifier_forward.1} parent=1 // pred_region
      %72 = dma.done [#allocation5], 2048
    $region49: #{genre_classifier_forward.1} parent=1 // pred_fallthru
      _
    %v74 = vld [vmem:[%s0] sm:$0xff]
    %v75 = vld [vmem:[%s0 + $0x8] sm:$0xff]
    %v76 = vld [vmem:[%s0 + $0x10] sm:$0xff]
    %v77 = vld [vmem:[%s0 + $0x18] sm:$0xff]
    %v78 = vld [vmem:[%s0 + $0x20] sm:$0xff]
    %v79 = vld [vmem:[%s0 + $0x28] sm:$0xff]
    %v80 = vld [vmem:[%s0 + $0x30] sm:$0xff]
    %v81 = vld [vmem:[%s0 + $0x38] sm:$0xff]
    %v90 = vcombine.low %v74, %v75
    %v91 = vcombine.high %v74, %v75
    %v92 = vcombine.low %v76, %v77
    %v93 = vcombine.high %v76, %v77
    %v95 = vunpack.c.l.s4 1983009808
    %v96 = vunpack.c.0.s8 %v95
    %v97 = vlaneseq
    %v98 = vshrl.u32 %v97, 7
    %v99 = vsub.s32 %v96, %v98
    %v100 = vrot.slane %v90, %v99
    %v102 = vunpack.c.l.s4 1983009808
    %v103 = vunpack.c.0.s8 %v102
    %v104 = vlaneseq
    %v105 = vshrl.u32 %v104, 7
    %v106 = vsub.s32 %v103, %v105
    %v107 = vrot.slane %v91, %v106
    %v109 = vunpack.c.l.s4 1983009808
    %v110 = vunpack.c.0.s8 %v109
    %v111 = vlaneseq
    %v112 = vshrl.u32 %v111, 7
    %v113 = vsub.s32 %v110, %v112
    %v114 = vrot.slane %v92, %v113
    %v116 = vunpack.c.l.s4 1983009808
    %v117 = vunpack.c.0.s8 %v116
    %v118 = vlaneseq
    %v119 = vshrl.u32 %v118, 7
    %v120 = vsub.s32 %v117, %v119
    %v121 = vrot.slane %v93, %v120
    %v122 = vcombine.low %v100, %v114
    %v123 = vcombine.high %v100, %v114
    %v124 = vcombine.low %v107, %v121
    %v125 = vcombine.high %v107, %v121
    %v126 = vcombine.low %v78, %v79
    %v127 = vcombine.high %v78, %v79
    %v128 = vcombine.low %v80, %v81
    %v129 = vcombine.high %v80, %v81
    %v131 = vunpack.c.l.s4 1983009808
    %v132 = vunpack.c.0.s8 %v131
    %v133 = vlaneseq
    %v134 = vshrl.u32 %v133, 7
    %v135 = vsub.s32 %v132, %v134
    %v136 = vrot.slane %v126, %v135
    %v138 = vunpack.c.l.s4 1983009808
    %v139 = vunpack.c.0.s8 %v138
    %v140 = vlaneseq
    %v141 = vshrl.u32 %v140, 7
    %v142 = vsub.s32 %v139, %v141
    %v143 = vrot.slane %v127, %v142
    %v145 = vunpack.c.l.s4 1983009808
    %v146 = vunpack.c.0.s8 %v145
    %v147 = vlaneseq
    %v148 = vshrl.u32 %v147, 7
    %v149 = vsub.s32 %v146, %v148
    %v150 = vrot.slane %v128, %v149
    %v152 = vunpack.c.l.s4 1983009808
    %v153 = vunpack.c.0.s8 %v152
    %v154 = vlaneseq
    %v155 = vshrl.u32 %v154, 7
    %v156 = vsub.s32 %v153, %v155
    %v157 = vrot.slane %v129, %v156
    %v158 = vcombine.low %v136, %v150
    %v159 = vcombine.high %v136, %v150
    %v160 = vcombine.low %v143, %v157
    %v161 = vcombine.high %v143, %v157
    %v170 = vpack.c.bf16 %v158, %v122
    %v171 = vpack.c.bf16 %v159, %v123
    %v172 = vpack.c.bf16 %v160, %v124
    %v173 = vpack.c.bf16 %v161, %v125
    %v174 = vld [vmem:[#allocation2] sm:$0xff]
    %v175 = vld [vmem:[#allocation2 + $0x8] sm:$0xff]
    %v176 = vld [vmem:[#allocation2 + $0x10] sm:$0xff]
    %v177 = vld [vmem:[#allocation2 + $0x18] sm:$0xff]
    %v178 = vld [vmem:[#allocation2 + $0x20] sm:$0xff]
    %v179 = vld [vmem:[#allocation2 + $0x28] sm:$0xff]
    %v180 = vld [vmem:[#allocation2 + $0x30] sm:$0xff]
    %v181 = vld [vmem:[#allocation2 + $0x38] sm:$0xff]
    %v182 = vld [vmem:[#allocation2 + $0x40] sm:$0xff]
    %v183 = vld [vmem:[#allocation2 + $0x48] sm:$0xff]
    %v184 = vld [vmem:[#allocation2 + $0x50] sm:$0xff]
    %v185 = vld [vmem:[#allocation2 + $0x58] sm:$0xff]
    %v186 = vld [vmem:[#allocation2 + $0x60] sm:$0xff]
    %v187 = vld [vmem:[#allocation2 + $0x68] sm:$0xff]
    %v188 = vld [vmem:[#allocation2 + $0x70] sm:$0xff]
    %v189 = vld [vmem:[#allocation2 + $0x78] sm:$0xff]
    %v190 = vld [vmem:[#allocation2 + $0x80] sm:$0xff]
    %v191 = vld [vmem:[#allocation2 + $0x88] sm:$0xff]
    %v192 = vld [vmem:[#allocation2 + $0x90] sm:$0xff]
    %v193 = vld [vmem:[#allocation2 + $0x98] sm:$0xff]
    %v194 = vld [vmem:[#allocation2 + $0xa0] sm:$0xff]
    %v195 = vld [vmem:[#allocation2 + $0xa8] sm:$0xff]
    %v196 = vld [vmem:[#allocation2 + $0xb0] sm:$0xff]
    %v197 = vld [vmem:[#allocation2 + $0xb8] sm:$0xff]
    %v198 = vld [vmem:[#allocation2 + $0xc0] sm:$0xff]
    %v199 = vld [vmem:[#allocation2 + $0xc8] sm:$0xff]
    %v200 = vld [vmem:[#allocation2 + $0xd0] sm:$0xff]
    %v201 = vld [vmem:[#allocation2 + $0xd8] sm:$0xff]
    %v202 = vld [vmem:[#allocation2 + $0xe0] sm:$0xff]
    %v203 = vld [vmem:[#allocation2 + $0xe8] sm:$0xff]
    %v204 = vld [vmem:[#allocation2 + $0xf0] sm:$0xff]
    %v205 = vld [vmem:[#allocation2 + $0xf8] sm:$0xff]
    %v206 = vld [vmem:[#allocation2 + $0x100] sm:$0xff]
    %v207 = vld [vmem:[#allocation2 + $0x108] sm:$0xff]
    %v208 = vld [vmem:[#allocation2 + $0x110] sm:$0xff]
    %v209 = vld [vmem:[#allocation2 + $0x118] sm:$0xff]
    %v210 = vld [vmem:[#allocation2 + $0x120] sm:$0xff]
    %v211 = vld [vmem:[#allocation2 + $0x128] sm:$0xff]
    %v212 = vld [vmem:[#allocation2 + $0x130] sm:$0xff]
    %v213 = vld [vmem:[#allocation2 + $0x138] sm:$0xff]
    %v214 = vld [vmem:[#allocation2 + $0x140] sm:$0xff]
    %v215 = vld [vmem:[#allocation2 + $0x148] sm:$0xff]
    %v216 = vld [vmem:[#allocation2 + $0x150] sm:$0xff]
    %v217 = vld [vmem:[#allocation2 + $0x158] sm:$0xff]
    %v218 = vld [vmem:[#allocation2 + $0x160] sm:$0xff]
    %v219 = vld [vmem:[#allocation2 + $0x168] sm:$0xff]
    %v220 = vld [vmem:[#allocation2 + $0x170] sm:$0xff]
    %v221 = vld [vmem:[#allocation2 + $0x178] sm:$0xff]
    %v222 = vld [vmem:[#allocation2 + $0x180] sm:$0xff]
    %v223 = vld [vmem:[#allocation2 + $0x188] sm:$0xff]
    %v224 = vld [vmem:[#allocation2 + $0x190] sm:$0xff]
    %v225 = vld [vmem:[#allocation2 + $0x198] sm:$0xff]
    %v226 = vld [vmem:[#allocation2 + $0x1a0] sm:$0xff]
    %v227 = vld [vmem:[#allocation2 + $0x1a8] sm:$0xff]
    %v228 = vld [vmem:[#allocation2 + $0x1b0] sm:$0xff]
    %v229 = vld [vmem:[#allocation2 + $0x1b8] sm:$0xff]
    %v230 = vld [vmem:[#allocation2 + $0x1c0] sm:$0xff]
    %v231 = vld [vmem:[#allocation2 + $0x1c8] sm:$0xff]
    %v232 = vld [vmem:[#allocation2 + $0x1d0] sm:$0xff]
    %v233 = vld [vmem:[#allocation2 + $0x1d8] sm:$0xff]
    %v234 = vld [vmem:[#allocation2 + $0x1e0] sm:$0xff]
    %v235 = vld [vmem:[#allocation2 + $0x1e8] sm:$0xff]
    %v236 = vld [vmem:[#allocation2 + $0x1f0] sm:$0xff]
    %v237 = vld [vmem:[#allocation2 + $0x1f8] sm:$0xff]
    %v238 = vld [vmem:[#allocation2 + $0x200] sm:$0xff]
    %v239 = vld [vmem:[#allocation2 + $0x208] sm:$0xff]
    %v240 = vld [vmem:[#allocation2 + $0x210] sm:$0xff]
    %v241 = vld [vmem:[#allocation2 + $0x218] sm:$0xff]
    %v242 = vld [vmem:[#allocation2 + $0x220] sm:$0xff]
    %v243 = vld [vmem:[#allocation2 + $0x228] sm:$0xff]
    %v244 = vld [vmem:[#allocation2 + $0x230] sm:$0xff]
    %v245 = vld [vmem:[#allocation2 + $0x238] sm:$0xff]
    %v246 = vld [vmem:[#allocation2 + $0x240] sm:$0xff]
    %v247 = vld [vmem:[#allocation2 + $0x248] sm:$0xff]
    %v248 = vld [vmem:[#allocation2 + $0x250] sm:$0xff]
    %v249 = vld [vmem:[#allocation2 + $0x258] sm:$0xff]
    %v250 = vld [vmem:[#allocation2 + $0x260] sm:$0xff]
    %v251 = vld [vmem:[#allocation2 + $0x268] sm:$0xff]
    %v252 = vld [vmem:[#allocation2 + $0x270] sm:$0xff]
    %v253 = vld [vmem:[#allocation2 + $0x278] sm:$0xff]
    %v254 = vld [vmem:[#allocation2 + $0x280] sm:$0xff]
    %v255 = vld [vmem:[#allocation2 + $0x288] sm:$0xff]
    %v256 = vld [vmem:[#allocation2 + $0x290] sm:$0xff]
    %v257 = vld [vmem:[#allocation2 + $0x298] sm:$0xff]
    %v258 = vld [vmem:[#allocation2 + $0x2a0] sm:$0xff]
    %v259 = vld [vmem:[#allocation2 + $0x2a8] sm:$0xff]
    %v260 = vld [vmem:[#allocation2 + $0x2b0] sm:$0xff]
    %v261 = vld [vmem:[#allocation2 + $0x2b8] sm:$0xff]
    %v262 = vld [vmem:[#allocation2 + $0x2c0] sm:$0xff]
    %v263 = vld [vmem:[#allocation2 + $0x2c8] sm:$0xff]
    %v264 = vld [vmem:[#allocation2 + $0x2d0] sm:$0xff]
    %v265 = vld [vmem:[#allocation2 + $0x2d8] sm:$0xff]
    %v266 = vld [vmem:[#allocation2 + $0x2e0] sm:$0xff]
    %v267 = vld [vmem:[#allocation2 + $0x2e8] sm:$0xff]
    %v268 = vld [vmem:[#allocation2 + $0x2f0] sm:$0xff]
    %v269 = vld [vmem:[#allocation2 + $0x2f8] sm:$0xff]
    %v270 = vld [vmem:[#allocation2 + $0x300] sm:$0xff]
    %v271 = vld [vmem:[#allocation2 + $0x308] sm:$0xff]
    %v272 = vld [vmem:[#allocation2 + $0x310] sm:$0xff]
    %v273 = vld [vmem:[#allocation2 + $0x318] sm:$0xff]
    %v274 = vld [vmem:[#allocation2 + $0x320] sm:$0xff]
    %v275 = vld [vmem:[#allocation2 + $0x328] sm:$0xff]
    %v276 = vld [vmem:[#allocation2 + $0x330] sm:$0xff]
    %v277 = vld [vmem:[#allocation2 + $0x338] sm:$0xff]
    %v278 = vld [vmem:[%s2] sm:$0xf]
    %v280 = vlaneseq
    %v281 = vshrl.u32 %v280, 7
    %v282 = vsub.s32 0, %v281
    %v283 = vrot.slane %v278, %v282
    %v284 = vlaneseq
    %v285 = vshrl.u32 %v284, 7
    %v286 = vsub.s32 1, %v285
    %v287 = vrot.slane %v278, %v286
    %v288 = vlaneseq
    %v289 = vshrl.u32 %v288, 7
    %v290 = vsub.s32 2, %v289
    %v291 = vrot.slane %v278, %v290
    %v292 = vlaneseq
    %v293 = vshrl.u32 %v292, 7
    %v294 = vsub.s32 3, %v293
    %v295 = vrot.slane %v278, %v294
    %v404 = vunpack.c.l.b16 %v174
    %v405 = vunpack.c.h.b16 %v174
    %v406 = vunpack.c.l.b16 %v175
    %v407 = vunpack.c.h.b16 %v175
    %v408 = vunpack.c.l.b16 %v176
    %v409 = vunpack.c.h.b16 %v176
    %v410 = vunpack.c.l.b16 %v177
    %v411 = vunpack.c.h.b16 %v177
    %v412 = vunpack.c.l.b16 %v178
    %v413 = vunpack.c.h.b16 %v178
    %v414 = vunpack.c.l.b16 %v179
    %v415 = vunpack.c.h.b16 %v179
    %v416 = vunpack.c.l.b16 %v180
    %v417 = vunpack.c.h.b16 %v180
    %v418 = vunpack.c.l.b16 %v181
    %v419 = vunpack.c.h.b16 %v181
    %v420 = vunpack.c.l.b16 %v182
    %v421 = vunpack.c.h.b16 %v182
    %v422 = vunpack.c.l.b16 %v183
    %v423 = vunpack.c.h.b16 %v183
    %v424 = vunpack.c.l.b16 %v184
    %v425 = vunpack.c.h.b16 %v184
    %v426 = vunpack.c.l.b16 %v185
    %v427 = vunpack.c.h.b16 %v185
    %v428 = vunpack.c.l.b16 %v186
    %v429 = vunpack.c.h.b16 %v186
    %v430 = vunpack.c.l.b16 %v187
    %v431 = vunpack.c.h.b16 %v187
    %v432 = vunpack.c.l.b16 %v188
    %v433 = vunpack.c.h.b16 %v188
    %v434 = vunpack.c.l.b16 %v189
    %v435 = vunpack.c.h.b16 %v189
    %v436 = vunpack.c.l.b16 %v190
    %v437 = vunpack.c.h.b16 %v190
    %v438 = vunpack.c.l.b16 %v191
    %v439 = vunpack.c.h.b16 %v191
    %v440 = vunpack.c.l.b16 %v192
    %v441 = vunpack.c.h.b16 %v192
    %v442 = vunpack.c.l.b16 %v193
    %v443 = vunpack.c.h.b16 %v193
    %v444 = vunpack.c.l.b16 %v194
    %v445 = vunpack.c.h.b16 %v194
    %v446 = vunpack.c.l.b16 %v195
    %v447 = vunpack.c.h.b16 %v195
    %v448 = vunpack.c.l.b16 %v196
    %v449 = vunpack.c.h.b16 %v196
    %v450 = vunpack.c.l.b16 %v197
    %v451 = vunpack.c.h.b16 %v197
    %v452 = vunpack.c.l.b16 %v198
    %v453 = vunpack.c.h.b16 %v198
    %v454 = vunpack.c.l.b16 %v199
    %v455 = vunpack.c.h.b16 %v199
    %v456 = vunpack.c.l.b16 %v200
    %v457 = vunpack.c.h.b16 %v200
    %v458 = vunpack.c.l.b16 %v201
    %v459 = vunpack.c.h.b16 %v201
    %v460 = vunpack.c.l.b16 %v202
    %v461 = vunpack.c.h.b16 %v202
    %v462 = vunpack.c.l.b16 %v203
    %v463 = vunpack.c.h.b16 %v203
    %v464 = vunpack.c.l.b16 %v204
    %v465 = vunpack.c.h.b16 %v204
    %v466 = vunpack.c.l.b16 %v205
    %v467 = vunpack.c.h.b16 %v205
    %v468 = vunpack.c.l.b16 %v206
    %v469 = vunpack.c.h.b16 %v206
    %v470 = vunpack.c.l.b16 %v207
    %v471 = vunpack.c.h.b16 %v207
    %v472 = vunpack.c.l.b16 %v208
    %v473 = vunpack.c.h.b16 %v208
    %v474 = vunpack.c.l.b16 %v209
    %v475 = vunpack.c.h.b16 %v209
    %v476 = vunpack.c.l.b16 %v210
    %v477 = vunpack.c.h.b16 %v210
    %v478 = vunpack.c.l.b16 %v211
    %v479 = vunpack.c.h.b16 %v211
    %v480 = vunpack.c.l.b16 %v212
    %v481 = vunpack.c.h.b16 %v212
    %v482 = vunpack.c.l.b16 %v213
    %v483 = vunpack.c.h.b16 %v213
    %v484 = vunpack.c.l.b16 %v214
    %v485 = vunpack.c.h.b16 %v214
    %v486 = vunpack.c.l.b16 %v215
    %v487 = vunpack.c.h.b16 %v215
    %v488 = vunpack.c.l.b16 %v216
    %v489 = vunpack.c.h.b16 %v216
    %v490 = vunpack.c.l.b16 %v217
    %v491 = vunpack.c.h.b16 %v217
    %v492 = vunpack.c.l.b16 %v218
    %v493 = vunpack.c.h.b16 %v218
    %v494 = vunpack.c.l.b16 %v219
    %v495 = vunpack.c.h.b16 %v219
    %v496 = vunpack.c.l.b16 %v220
    %v497 = vunpack.c.h.b16 %v220
    %v498 = vunpack.c.l.b16 %v221
    %v499 = vunpack.c.h.b16 %v221
    %v500 = vunpack.c.l.b16 %v222
    %v501 = vunpack.c.h.b16 %v222
    %v502 = vunpack.c.l.b16 %v223
    %v503 = vunpack.c.h.b16 %v223
    %v504 = vunpack.c.l.b16 %v224
    %v505 = vunpack.c.h.b16 %v224
    %v506 = vunpack.c.l.b16 %v225
    %v507 = vunpack.c.h.b16 %v225
    %v508 = vunpack.c.l.b16 %v226
    %v509 = vunpack.c.h.b16 %v226
    %v510 = vunpack.c.l.b16 %v227
    %v511 = vunpack.c.h.b16 %v227
    %v512 = vunpack.c.l.b16 %v228
    %v513 = vunpack.c.h.b16 %v228
    %v514 = vunpack.c.l.b16 %v229
    %v515 = vunpack.c.h.b16 %v229
    %v516 = vunpack.c.l.b16 %v230
    %v517 = vunpack.c.h.b16 %v230
    %v518 = vunpack.c.l.b16 %v231
    %v519 = vunpack.c.h.b16 %v231
    %v520 = vunpack.c.l.b16 %v232
    %v521 = vunpack.c.h.b16 %v232
    %v522 = vunpack.c.l.b16 %v233
    %v523 = vunpack.c.h.b16 %v233
    %v524 = vunpack.c.l.b16 %v234
    %v525 = vunpack.c.h.b16 %v234
    %v526 = vunpack.c.l.b16 %v235
    %v527 = vunpack.c.h.b16 %v235
    %v528 = vunpack.c.l.b16 %v236
    %v529 = vunpack.c.h.b16 %v236
    %v530 = vunpack.c.l.b16 %v237
    %v531 = vunpack.c.h.b16 %v237
    %v532 = vunpack.c.l.b16 %v238
    %v533 = vunpack.c.h.b16 %v238
    %v534 = vunpack.c.l.b16 %v239
    %v535 = vunpack.c.h.b16 %v239
    %v536 = vunpack.c.l.b16 %v240
    %v537 = vunpack.c.h.b16 %v240
    %v538 = vunpack.c.l.b16 %v241
    %v539 = vunpack.c.h.b16 %v241
    %v540 = vunpack.c.l.b16 %v242
    %v541 = vunpack.c.h.b16 %v242
    %v542 = vunpack.c.l.b16 %v243
    %v543 = vunpack.c.h.b16 %v243
    %v544 = vunpack.c.l.b16 %v244
    %v545 = vunpack.c.h.b16 %v244
    %v546 = vunpack.c.l.b16 %v245
    %v547 = vunpack.c.h.b16 %v245
    %v548 = vunpack.c.l.b16 %v246
    %v549 = vunpack.c.h.b16 %v246
    %v550 = vunpack.c.l.b16 %v247
    %v551 = vunpack.c.h.b16 %v247
    %v552 = vunpack.c.l.b16 %v248
    %v553 = vunpack.c.h.b16 %v248
    %v554 = vunpack.c.l.b16 %v249
    %v555 = vunpack.c.h.b16 %v249
    %v556 = vunpack.c.l.b16 %v250
    %v557 = vunpack.c.h.b16 %v250
    %v558 = vunpack.c.l.b16 %v251
    %v559 = vunpack.c.h.b16 %v251
    %v560 = vunpack.c.l.b16 %v252
    %v561 = vunpack.c.h.b16 %v252
    %v562 = vunpack.c.l.b16 %v253
    %v563 = vunpack.c.h.b16 %v253
    %v564 = vunpack.c.l.b16 %v254
    %v565 = vunpack.c.h.b16 %v254
    %v566 = vunpack.c.l.b16 %v255
    %v567 = vunpack.c.h.b16 %v255
    %v568 = vunpack.c.l.b16 %v256
    %v569 = vunpack.c.h.b16 %v256
    %v570 = vunpack.c.l.b16 %v257
    %v571 = vunpack.c.h.b16 %v257
    %v572 = vunpack.c.l.b16 %v258
    %v573 = vunpack.c.h.b16 %v258
    %v574 = vunpack.c.l.b16 %v259
    %v575 = vunpack.c.h.b16 %v259
    %v576 = vunpack.c.l.b16 %v260
    %v577 = vunpack.c.h.b16 %v260
    %v578 = vunpack.c.l.b16 %v261
    %v579 = vunpack.c.h.b16 %v261
    %v580 = vunpack.c.l.b16 %v262
    %v581 = vunpack.c.h.b16 %v262
    %v582 = vunpack.c.l.b16 %v263
    %v583 = vunpack.c.h.b16 %v263
    %v584 = vunpack.c.l.b16 %v264
    %v585 = vunpack.c.h.b16 %v264
    %v586 = vunpack.c.l.b16 %v265
    %v587 = vunpack.c.h.b16 %v265
    %v588 = vunpack.c.l.b16 %v266
    %v589 = vunpack.c.h.b16 %v266
    %v590 = vunpack.c.l.b16 %v267
    %v591 = vunpack.c.h.b16 %v267
    %v592 = vunpack.c.l.b16 %v268
    %v593 = vunpack.c.h.b16 %v268
    %v594 = vunpack.c.l.b16 %v269
    %v595 = vunpack.c.h.b16 %v269
    %v596 = vunpack.c.l.b16 %v270
    %v597 = vunpack.c.h.b16 %v270
    %v598 = vunpack.c.l.b16 %v271
    %v599 = vunpack.c.h.b16 %v271
    %v600 = vunpack.c.l.b16 %v272
    %v601 = vunpack.c.h.b16 %v272
    %v602 = vunpack.c.l.b16 %v273
    %v603 = vunpack.c.h.b16 %v273
    %v604 = vunpack.c.l.b16 %v274
    %v605 = vunpack.c.h.b16 %v274
    %v606 = vunpack.c.l.b16 %v275
    %v607 = vunpack.c.h.b16 %v275
    %v608 = vunpack.c.l.b16 %v276
    %v609 = vunpack.c.h.b16 %v276
    %v610 = vunpack.c.l.b16 %v277
    %v611 = vunpack.c.h.b16 %v277
    %v612 = vpack.c.b16 %v408, %v404
    %v613 = vpack.c.b16 %v409, %v405
    %v614 = vpack.c.b16 %v410, %v406
    %v615 = vpack.c.b16 %v411, %v407
    %v616 = vpack.c.b16 %v416, %v412
    %v617 = vpack.c.b16 %v417, %v413
    %v618 = vpack.c.b16 %v418, %v414
    %v619 = vpack.c.b16 %v419, %v415
    %v620 = vpack.c.b16 %v424, %v420
    %v621 = vpack.c.b16 %v425, %v421
    %v622 = vpack.c.b16 %v426, %v422
    %v623 = vpack.c.b16 %v427, %v423
    %v624 = vpack.c.b16 %v432, %v428
    %v625 = vpack.c.b16 %v433, %v429
    %v626 = vpack.c.b16 %v434, %v430
    %v627 = vpack.c.b16 %v435, %v431
    %v628 = vpack.c.b16 %v440, %v436
    %v629 = vpack.c.b16 %v441, %v437
    %v630 = vpack.c.b16 %v442, %v438
    %v631 = vpack.c.b16 %v443, %v439
    %v632 = vpack.c.b16 %v448, %v444
    %v633 = vpack.c.b16 %v449, %v445
    %v634 = vpack.c.b16 %v450, %v446
    %v635 = vpack.c.b16 %v451, %v447
    %v636 = vpack.c.b16 %v456, %v452
    %v637 = vpack.c.b16 %v457, %v453
    %v638 = vpack.c.b16 %v458, %v454
    %v639 = vpack.c.b16 %v459, %v455
    %v640 = vpack.c.b16 %v464, %v460
    %v641 = vpack.c.b16 %v465, %v461
    %v642 = vpack.c.b16 %v466, %v462
    %v643 = vpack.c.b16 %v467, %v463
    %v644 = vpack.c.b16 %v472, %v468
    %v645 = vpack.c.b16 %v473, %v469
    %v646 = vpack.c.b16 %v474, %v470
    %v647 = vpack.c.b16 %v475, %v471
    %v648 = vpack.c.b16 %v480, %v476
    %v649 = vpack.c.b16 %v481, %v477
    %v650 = vpack.c.b16 %v482, %v478
    %v651 = vpack.c.b16 %v483, %v479
    %v652 = vpack.c.b16 %v488, %v484
    %v653 = vpack.c.b16 %v489, %v485
    %v654 = vpack.c.b16 %v490, %v486
    %v655 = vpack.c.b16 %v491, %v487
    %v656 = vpack.c.b16 %v496, %v492
    %v657 = vpack.c.b16 %v497, %v493
    %v658 = vpack.c.b16 %v498, %v494
    %v659 = vpack.c.b16 %v499, %v495
    %v660 = vpack.c.b16 %v504, %v500
    %v661 = vpack.c.b16 %v505, %v501
    %v662 = vpack.c.b16 %v506, %v502
    %v663 = vpack.c.b16 %v507, %v503
    %v664 = vpack.c.b16 %v512, %v508
    %v665 = vpack.c.b16 %v513, %v509
    %v666 = vpack.c.b16 %v514, %v510
    %v667 = vpack.c.b16 %v515, %v511
    %v668 = vpack.c.b16 %v520, %v516
    %v669 = vpack.c.b16 %v521, %v517
    %v670 = vpack.c.b16 %v522, %v518
    %v671 = vpack.c.b16 %v523, %v519
    %v672 = vpack.c.b16 %v528, %v524
    %v673 = vpack.c.b16 %v529, %v525
    %v674 = vpack.c.b16 %v530, %v526
    %v675 = vpack.c.b16 %v531, %v527
    %v676 = vpack.c.b16 %v536, %v532
    %v677 = vpack.c.b16 %v537, %v533
    %v678 = vpack.c.b16 %v538, %v534
    %v679 = vpack.c.b16 %v539, %v535
    %v680 = vpack.c.b16 %v544, %v540
    %v681 = vpack.c.b16 %v545, %v541
    %v682 = vpack.c.b16 %v546, %v542
    %v683 = vpack.c.b16 %v547, %v543
    %v684 = vpack.c.b16 %v552, %v548
    %v685 = vpack.c.b16 %v553, %v549
    %v686 = vpack.c.b16 %v554, %v550
    %v687 = vpack.c.b16 %v555, %v551
    %v688 = vpack.c.b16 %v560, %v556
    %v689 = vpack.c.b16 %v561, %v557
    %v690 = vpack.c.b16 %v562, %v558
    %v691 = vpack.c.b16 %v563, %v559
    %v692 = vpack.c.b16 %v568, %v564
    %v693 = vpack.c.b16 %v569, %v565
    %v694 = vpack.c.b16 %v570, %v566
    %v695 = vpack.c.b16 %v571, %v567
    %v696 = vpack.c.b16 %v576, %v572
    %v697 = vpack.c.b16 %v577, %v573
    %v698 = vpack.c.b16 %v578, %v574
    %v699 = vpack.c.b16 %v579, %v575
    %v700 = vpack.c.b16 %v584, %v580
    %v701 = vpack.c.b16 %v585, %v581
    %v702 = vpack.c.b16 %v586, %v582
    %v703 = vpack.c.b16 %v587, %v583
    %v704 = vpack.c.b16 %v592, %v588
    %v705 = vpack.c.b16 %v593, %v589
    %v706 = vpack.c.b16 %v594, %v590
    %v707 = vpack.c.b16 %v595, %v591
    %v708 = vpack.c.b16 %v600, %v596
    %v709 = vpack.c.b16 %v601, %v597
    %v710 = vpack.c.b16 %v602, %v598
    %v711 = vpack.c.b16 %v603, %v599
    %v712 = vpack.c.b16 %v608, %v604
    %v713 = vpack.c.b16 %v609, %v605
    %v714 = vpack.c.b16 %v610, %v606
    %v715 = vpack.c.b16 %v611, %v607
    %vm820 = vcmask 261120
    %v822 = vsel %vm820, %v173, 0
    %824 = vmatprep.subr.bf16.mxu0 %v613
    %825 = vmatpush1.bf16.msra.mxu0 %v612
    %826 = vmatprep.subr.bf16.mxu0 %v617
    %827 = vmatpush1.bf16.msra.mxu0 %v616
    %828 = vmatprep.subr.bf16.mxu0 %v621
    %829 = vmatpush1.bf16.msra.mxu0 %v620
    %830 = vmatprep.subr.bf16.mxu0 %v625
    %831 = vmatpush1.bf16.msra.mxu0 %v624
    %832 = vmatprep.subr.bf16.mxu0 %v629
    %833 = vmatpush1.bf16.msra.mxu0 %v628
    %834 = vmatprep.subr.bf16.mxu0 %v633
    %835 = vmatpush1.bf16.msra.mxu0 %v632
    %836 = vmatprep.subr.bf16.mxu0 %v637
    %837 = vmatpush1.bf16.msra.mxu0 %v636
    %838 = vmatprep.subr.bf16.mxu0 %v641
    %839 = vmatpush1.bf16.msra.mxu0 %v640
    %840 = vmatprep.subr.bf16.mxu0 %v645
    %841 = vmatpush1.bf16.msra.mxu0 %v644
    %842 = vmatprep.subr.bf16.mxu0 %v649
    %843 = vmatpush1.bf16.msra.mxu0 %v648
    %844 = vmatprep.subr.bf16.mxu0 %v653
    %845 = vmatpush1.bf16.msra.mxu0 %v652
    %846 = vmatprep.subr.bf16.mxu0 %v657
    %847 = vmatpush1.bf16.msra.mxu0 %v656
    %848 = vmatprep.subr.bf16.mxu0 %v661
    %849 = vmatpush1.bf16.msra.mxu0 %v660
    %850 = vmatprep.subr.bf16.mxu0 %v665
    %851 = vmatpush1.bf16.msra.mxu0 %v664
    %852 = vmatprep.subr.bf16.mxu0 %v669
    %853 = vmatpush1.bf16.msra.mxu0 %v668
    %854 = vmatprep.subr.bf16.mxu0 %v673
    %855 = vmatpush1.bf16.msra.mxu0 %v672
    %856 = vmatprep.mubr.bf16.mxu0 %v171
    %857 = vmatmul.mubr.bf16.gmra.mrb[0].mxu0 %v170
    %v858 = vpop.f32.mrb[0].mxu0
    %v859 = vadd.f32 %v283, %v858
    %v860 = vpop.f32.mrb[0].mxu0
    %v861 = vadd.f32 %v287, %v860
    %v862 = vpop.f32.mrb[0].mxu0
    %v863 = vadd.f32 %v283, %v862
    %v864 = vpop.f32.mrb[0].mxu0
    %v865 = vadd.f32 %v287, %v864
    %866 = vdwg.mxu0
    %867 = vmatprep.subr.bf16.mxu0 %v677
    %868 = vmatpush1.bf16.msra.mxu0 %v676
    %869 = vmatprep.subr.bf16.mxu0 %v681
    %870 = vmatpush1.bf16.msra.mxu0 %v680
    %871 = vmatprep.subr.bf16.mxu0 %v685
    %872 = vmatpush1.bf16.msra.mxu0 %v684
    %873 = vmatprep.subr.bf16.mxu0 %v689
    %874 = vmatpush1.bf16.msra.mxu0 %v688
    %875 = vmatprep.subr.bf16.mxu0 %v693
    %876 = vmatpush1.bf16.msra.mxu0 %v692
    %877 = vmatprep.subr.bf16.mxu0 %v697
    %878 = vmatpush1.bf16.msra.mxu0 %v696
    %879 = vmatprep.subr.bf16.mxu0 %v701
    %880 = vmatpush1.bf16.msra.mxu0 %v700
    %881 = vmatprep.subr.bf16.mxu0 %v705
    %882 = vmatpush1.bf16.msra.mxu0 %v704
    %883 = vmatprep.subr.bf16.mxu0 %v709
    %884 = vmatpush1.bf16.msra.mxu0 %v708
    %885 = vmatprep.subr.bf16.mxu0 %v713
    %886 = vmatpush1.bf16.msra.mxu0 %v712
    %887 = vmatprep.subr.bf16.mxu0 0
    %888 = vmatpush1.bf16.msra.mxu0 0
    %889 = vmatprep.subr.bf16.mxu0 0
    %890 = vmatpush1.bf16.msra.mxu0 0
    %891 = vmatprep.subr.bf16.mxu0 0
    %892 = vmatpush1.bf16.msra.mxu0 0
    %893 = vmatprep.subr.bf16.mxu0 0
    %894 = vmatpush1.bf16.msra.mxu0 0
    %895 = vmatprep.subr.bf16.mxu0 0
    %896 = vmatpush1.bf16.msra.mxu0 0
    %897 = vmatprep.subr.bf16.mxu0 0
    %898 = vmatpush1.bf16.msra.mxu0 0
    %899 = vmatprep.mubr.bf16.mxu0 %v822
    %900 = vmatmul.mubr.bf16.gmra.mrb[0].mxu0 %v172
    %v901 = vpop.f32.mrb[0].mxu0
    %v902 = vadd.f32 %v859, %v901
    %v903 = vpop.f32.mrb[0].mxu0
    %v904 = vadd.f32 %v861, %v903
    %v905 = vpop.f32.mrb[0].mxu0
    %v906 = vadd.f32 %v863, %v905
    %v907 = vpop.f32.mrb[0].mxu0
    %v908 = vadd.f32 %v865, %v907
    %909 = vdwg.mxu0
    %910 = vmatprep.subr.bf16.mxu0 %v615
    %911 = vmatpush1.bf16.msra.mxu0 %v614
    %912 = vmatprep.subr.bf16.mxu0 %v619
    %913 = vmatpush1.bf16.msra.mxu0 %v618
    %914 = vmatprep.subr.bf16.mxu0 %v623
    %915 = vmatpush1.bf16.msra.mxu0 %v622
    %916 = vmatprep.subr.bf16.mxu0 %v627
    %917 = vmatpush1.bf16.msra.mxu0 %v626
    %918 = vmatprep.subr.bf16.mxu0 %v631
    %919 = vmatpush1.bf16.msra.mxu0 %v630
    %920 = vmatprep.subr.bf16.mxu0 %v635
    %921 = vmatpush1.bf16.msra.mxu0 %v634
    %922 = vmatprep.subr.bf16.mxu0 %v639
    %923 = vmatpush1.bf16.msra.mxu0 %v638
    %924 = vmatprep.subr.bf16.mxu0 %v643
    %925 = vmatpush1.bf16.msra.mxu0 %v642
    %926 = vmatprep.subr.bf16.mxu0 %v647
    %927 = vmatpush1.bf16.msra.mxu0 %v646
    %928 = vmatprep.subr.bf16.mxu0 %v651
    %929 = vmatpush1.bf16.msra.mxu0 %v650
    %930 = vmatprep.subr.bf16.mxu0 %v655
    %931 = vmatpush1.bf16.msra.mxu0 %v654
    %932 = vmatprep.subr.bf16.mxu0 %v659
    %933 = vmatpush1.bf16.msra.mxu0 %v658
    %934 = vmatprep.subr.bf16.mxu0 %v663
    %935 = vmatpush1.bf16.msra.mxu0 %v662
    %936 = vmatprep.subr.bf16.mxu0 %v667
    %937 = vmatpush1.bf16.msra.mxu0 %v666
    %938 = vmatprep.subr.bf16.mxu0 %v671
    %939 = vmatpush1.bf16.msra.mxu0 %v670
    %940 = vmatprep.subr.bf16.mxu0 %v675
    %941 = vmatpush1.bf16.msra.mxu0 %v674
    %942 = vmatprep.mubr.bf16.mxu0 %v171
    %943 = vmatmul.mubr.bf16.gmra.mrb[0].mxu0 %v170
    %v944 = vpop.f32.mrb[0].mxu0
    %v945 = vadd.f32 %v291, %v944
    %v946 = vpop.f32.mrb[0].mxu0
    %v947 = vadd.f32 %v295, %v946
    %v948 = vpop.f32.mrb[0].mxu0
    %v949 = vadd.f32 %v291, %v948
    %v950 = vpop.f32.mrb[0].mxu0
    %v951 = vadd.f32 %v295, %v950
    %952 = vdwg.mxu0
    %953 = vmatprep.subr.bf16.mxu0 %v679
    %954 = vmatpush1.bf16.msra.mxu0 %v678
    %955 = vmatprep.subr.bf16.mxu0 %v683
    %956 = vmatpush1.bf16.msra.mxu0 %v682
    %957 = vmatprep.subr.bf16.mxu0 %v687
    %958 = vmatpush1.bf16.msra.mxu0 %v686
    %959 = vmatprep.subr.bf16.mxu0 %v691
    %960 = vmatpush1.bf16.msra.mxu0 %v690
    %961 = vmatprep.subr.bf16.mxu0 %v695
    %962 = vmatpush1.bf16.msra.mxu0 %v694
    %963 = vmatprep.subr.bf16.mxu0 %v699
    %964 = vmatpush1.bf16.msra.mxu0 %v698
    %965 = vmatprep.subr.bf16.mxu0 %v703
    %966 = vmatpush1.bf16.msra.mxu0 %v702
    %967 = vmatprep.subr.bf16.mxu0 %v707
    %968 = vmatpush1.bf16.msra.mxu0 %v706
    %969 = vmatprep.subr.bf16.mxu0 %v711
    %970 = vmatpush1.bf16.msra.mxu0 %v710
    %971 = vmatprep.subr.bf16.mxu0 %v715
    %972 = vmatpush1.bf16.msra.mxu0 %v714
    %973 = vmatprep.subr.bf16.mxu0 0
    %974 = vmatpush1.bf16.msra.mxu0 0
    %975 = vmatprep.subr.bf16.mxu0 0
    %976 = vmatpush1.bf16.msra.mxu0 0
    %977 = vmatprep.subr.bf16.mxu0 0
    %978 = vmatpush1.bf16.msra.mxu0 0
    %979 = vmatprep.subr.bf16.mxu0 0
    %980 = vmatpush1.bf16.msra.mxu0 0
    %981 = vmatprep.subr.bf16.mxu0 0
    %982 = vmatpush1.bf16.msra.mxu0 0
    %983 = vmatprep.subr.bf16.mxu0 0
    %984 = vmatpush1.bf16.msra.mxu0 0
    %985 = vmatprep.mubr.bf16.mxu0 %v822
    %986 = vmatmul.mubr.bf16.gmra.mrb[0].mxu0 %v172
    %v987 = vpop.f32.mrb[0].mxu0
    %v988 = vadd.f32 %v945, %v987
    %v989 = vpop.f32.mrb[0].mxu0
    %v990 = vadd.f32 %v947, %v989
    %v991 = vpop.f32.mrb[0].mxu0
    %v992 = vadd.f32 %v949, %v991
    %v993 = vpop.f32.mrb[0].mxu0
    %v994 = vadd.f32 %v951, %v993
    %995 = vdwg.mxu0
    %v996 = vmax.f32 %v902, 0.0
    %v997 = vmax.f32 %v904, 0.0
    %v998 = vmax.f32 %v988, 0.0
    %v999 = vmax.f32 %v990, 0.0
    %v1000 = vmax.f32 %v906, 0.0
    %v1001 = vmax.f32 %v908, 0.0
    %v1002 = vmax.f32 %v992, 0.0
    %v1003 = vmax.f32 %v994, 0.0
    %v1004 = vpack.c.bf16 %v1000, %v996
    %v1005 = vpack.c.bf16 %v1001, %v997
    %v1006 = vpack.c.bf16 %v1002, %v998
    %v1007 = vpack.c.bf16 %v1003, %v999
    %v1008 = vld [vmem:[#allocation4] sm:$0xff]
    %v1009 = vld [vmem:[#allocation4 + $0x8] sm:$0xff]
    %v1010 = vld [vmem:[#allocation4 + $0x10] sm:$0xff]
    %v1011 = vld [vmem:[#allocation4 + $0x18] sm:$0xff]
    %v1012 = vld [vmem:[#allocation4 + $0x20] sm:$0xff]
    %v1013 = vld [vmem:[#allocation4 + $0x28] sm:$0xff]
    %v1014 = vld [vmem:[#allocation4 + $0x30] sm:$0xff]
    %v1015 = vld [vmem:[#allocation4 + $0x38] sm:$0xff]
    %v1016 = vld [vmem:[#allocation4 + $0x40] sm:$0xff]
    %v1017 = vld [vmem:[#allocation4 + $0x48] sm:$0xff]
    %v1018 = vld [vmem:[#allocation4 + $0x50] sm:$0xff]
    %v1019 = vld [vmem:[#allocation4 + $0x58] sm:$0xff]
    %v1020 = vld [vmem:[#allocation4 + $0x60] sm:$0xff]
    %v1021 = vld [vmem:[#allocation4 + $0x68] sm:$0xff]
    %v1022 = vld [vmem:[#allocation4 + $0x70] sm:$0xff]
    %v1023 = vld [vmem:[#allocation4 + $0x78] sm:$0xff]
    %v1024 = vld [vmem:[#allocation4 + $0x80] sm:$0xff]
    %v1025 = vld [vmem:[#allocation4 + $0x88] sm:$0xff]
    %v1026 = vld [vmem:[#allocation4 + $0x90] sm:$0xff]
    %v1027 = vld [vmem:[#allocation4 + $0x98] sm:$0xff]
    %v1028 = vld [vmem:[#allocation4 + $0xa0] sm:$0xff]
    %v1029 = vld [vmem:[#allocation4 + $0xa8] sm:$0xff]
    %v1030 = vld [vmem:[#allocation4 + $0xb0] sm:$0xff]
    %v1031 = vld [vmem:[#allocation4 + $0xb8] sm:$0xff]
    %v1032 = vld [vmem:[#allocation4 + $0xc0] sm:$0xff]
    %v1033 = vld [vmem:[#allocation4 + $0xc8] sm:$0xff]
    %v1034 = vld [vmem:[#allocation4 + $0xd0] sm:$0xff]
    %v1035 = vld [vmem:[#allocation4 + $0xd8] sm:$0xff]
    %v1036 = vld [vmem:[#allocation4 + $0xe0] sm:$0xff]
    %v1037 = vld [vmem:[#allocation4 + $0xe8] sm:$0xff]
    %v1038 = vld [vmem:[#allocation4 + $0xf0] sm:$0xff]
    %v1039 = vld [vmem:[#allocation4 + $0xf8] sm:$0xff]
    %v1040 = vld [vmem:[#allocation4 + $0x100] sm:$0xff]
    %v1041 = vld [vmem:[#allocation4 + $0x108] sm:$0xff]
    %v1042 = vld [vmem:[#allocation4 + $0x110] sm:$0xff]
    %v1043 = vld [vmem:[#allocation4 + $0x118] sm:$0xff]
    %v1044 = vld [vmem:[#allocation4 + $0x120] sm:$0xff]
    %v1045 = vld [vmem:[#allocation4 + $0x128] sm:$0xff]
    %v1046 = vld [vmem:[#allocation4 + $0x130] sm:$0xff]
    %v1047 = vld [vmem:[#allocation4 + $0x138] sm:$0xff]
    %v1048 = vld [vmem:[#allocation4 + $0x140] sm:$0xff]
    %v1049 = vld [vmem:[#allocation4 + $0x148] sm:$0xff]
    %v1050 = vld [vmem:[#allocation4 + $0x150] sm:$0xff]
    %v1051 = vld [vmem:[#allocation4 + $0x158] sm:$0xff]
    %v1052 = vld [vmem:[#allocation4 + $0x160] sm:$0xff]
    %v1053 = vld [vmem:[#allocation4 + $0x168] sm:$0xff]
    %v1054 = vld [vmem:[#allocation4 + $0x170] sm:$0xff]
    %v1055 = vld [vmem:[#allocation4 + $0x178] sm:$0xff]
    %v1056 = vld [vmem:[#allocation4 + $0x180] sm:$0xff]
    %v1057 = vld [vmem:[#allocation4 + $0x188] sm:$0xff]
    %v1058 = vld [vmem:[#allocation4 + $0x190] sm:$0xff]
    %v1059 = vld [vmem:[#allocation4 + $0x198] sm:$0xff]
    %v1060 = vld [vmem:[#allocation4 + $0x1a0] sm:$0xff]
    %v1061 = vld [vmem:[#allocation4 + $0x1a8] sm:$0xff]
    %v1062 = vld [vmem:[#allocation4 + $0x1b0] sm:$0xff]
    %v1063 = vld [vmem:[#allocation4 + $0x1b8] sm:$0xff]
    %v1064 = vld [vmem:[#allocation4 + $0x1c0] sm:$0xff]
    %v1065 = vld [vmem:[#allocation4 + $0x1c8] sm:$0xff]
    %v1066 = vld [vmem:[#allocation4 + $0x1d0] sm:$0xff]
    %v1067 = vld [vmem:[#allocation4 + $0x1d8] sm:$0xff]
    %v1068 = vld [vmem:[#allocation4 + $0x1e0] sm:$0xff]
    %v1069 = vld [vmem:[#allocation4 + $0x1e8] sm:$0xff]
    %v1070 = vld [vmem:[#allocation4 + $0x1f0] sm:$0xff]
    %v1071 = vld [vmem:[#allocation4 + $0x1f8] sm:$0xff]
    %v1072 = vld [vmem:[%s4] sm:$0x3]
    %v1074 = vlaneseq
    %v1075 = vshrl.u32 %v1074, 7
    %v1076 = vsub.s32 0, %v1075
    %v1077 = vrot.slane %v1072, %v1076
    %v1078 = vlaneseq
    %v1079 = vshrl.u32 %v1078, 7
    %v1080 = vsub.s32 1, %v1079
    %v1081 = vrot.slane %v1072, %v1080
    %v1148 = vunpack.c.l.b16 %v1008
    %v1149 = vunpack.c.h.b16 %v1008
    %v1150 = vunpack.c.l.b16 %v1009
    %v1151 = vunpack.c.h.b16 %v1009
    %v1152 = vunpack.c.l.b16 %v1010
    %v1153 = vunpack.c.h.b16 %v1010
    %v1154 = vunpack.c.l.b16 %v1011
    %v1155 = vunpack.c.h.b16 %v1011
    %v1156 = vunpack.c.l.b16 %v1012
    %v1157 = vunpack.c.h.b16 %v1012
    %v1158 = vunpack.c.l.b16 %v1013
    %v1159 = vunpack.c.h.b16 %v1013
    %v1160 = vunpack.c.l.b16 %v1014
    %v1161 = vunpack.c.h.b16 %v1014
    %v1162 = vunpack.c.l.b16 %v1015
    %v1163 = vunpack.c.h.b16 %v1015
    %v1164 = vunpack.c.l.b16 %v1016
    %v1165 = vunpack.c.h.b16 %v1016
    %v1166 = vunpack.c.l.b16 %v1017
    %v1167 = vunpack.c.h.b16 %v1017
    %v1168 = vunpack.c.l.b16 %v1018
    %v1169 = vunpack.c.h.b16 %v1018
    %v1170 = vunpack.c.l.b16 %v1019
    %v1171 = vunpack.c.h.b16 %v1019
    %v1172 = vunpack.c.l.b16 %v1020
    %v1173 = vunpack.c.h.b16 %v1020
    %v1174 = vunpack.c.l.b16 %v1021
    %v1175 = vunpack.c.h.b16 %v1021
    %v1176 = vunpack.c.l.b16 %v1022
    %v1177 = vunpack.c.h.b16 %v1022
    %v1178 = vunpack.c.l.b16 %v1023
    %v1179 = vunpack.c.h.b16 %v1023
    %v1180 = vunpack.c.l.b16 %v1024
    %v1181 = vunpack.c.h.b16 %v1024
    %v1182 = vunpack.c.l.b16 %v1025
    %v1183 = vunpack.c.h.b16 %v1025
    %v1184 = vunpack.c.l.b16 %v1026
    %v1185 = vunpack.c.h.b16 %v1026
    %v1186 = vunpack.c.l.b16 %v1027
    %v1187 = vunpack.c.h.b16 %v1027
    %v1188 = vunpack.c.l.b16 %v1028
    %v1189 = vunpack.c.h.b16 %v1028
    %v1190 = vunpack.c.l.b16 %v1029
    %v1191 = vunpack.c.h.b16 %v1029
    %v1192 = vunpack.c.l.b16 %v1030
    %v1193 = vunpack.c.h.b16 %v1030
    %v1194 = vunpack.c.l.b16 %v1031
    %v1195 = vunpack.c.h.b16 %v1031
    %v1196 = vunpack.c.l.b16 %v1032
    %v1197 = vunpack.c.h.b16 %v1032
    %v1198 = vunpack.c.l.b16 %v1033
    %v1199 = vunpack.c.h.b16 %v1033
    %v1200 = vunpack.c.l.b16 %v1034
    %v1201 = vunpack.c.h.b16 %v1034
    %v1202 = vunpack.c.l.b16 %v1035
    %v1203 = vunpack.c.h.b16 %v1035
    %v1204 = vunpack.c.l.b16 %v1036
    %v1205 = vunpack.c.h.b16 %v1036
    %v1206 = vunpack.c.l.b16 %v1037
    %v1207 = vunpack.c.h.b16 %v1037
    %v1208 = vunpack.c.l.b16 %v1038
    %v1209 = vunpack.c.h.b16 %v1038
    %v1210 = vunpack.c.l.b16 %v1039
    %v1211 = vunpack.c.h.b16 %v1039
    %v1212 = vunpack.c.l.b16 %v1040
    %v1213 = vunpack.c.h.b16 %v1040
    %v1214 = vunpack.c.l.b16 %v1041
    %v1215 = vunpack.c.h.b16 %v1041
    %v1216 = vunpack.c.l.b16 %v1042
    %v1217 = vunpack.c.h.b16 %v1042
    %v1218 = vunpack.c.l.b16 %v1043
    %v1219 = vunpack.c.h.b16 %v1043
    %v1220 = vunpack.c.l.b16 %v1044
    %v1221 = vunpack.c.h.b16 %v1044
    %v1222 = vunpack.c.l.b16 %v1045
    %v1223 = vunpack.c.h.b16 %v1045
    %v1224 = vunpack.c.l.b16 %v1046
    %v1225 = vunpack.c.h.b16 %v1046
    %v1226 = vunpack.c.l.b16 %v1047
    %v1227 = vunpack.c.h.b16 %v1047
    %v1228 = vunpack.c.l.b16 %v1048
    %v1229 = vunpack.c.h.b16 %v1048
    %v1230 = vunpack.c.l.b16 %v1049
    %v1231 = vunpack.c.h.b16 %v1049
    %v1232 = vunpack.c.l.b16 %v1050
    %v1233 = vunpack.c.h.b16 %v1050
    %v1234 = vunpack.c.l.b16 %v1051
    %v1235 = vunpack.c.h.b16 %v1051
    %v1236 = vunpack.c.l.b16 %v1052
    %v1237 = vunpack.c.h.b16 %v1052
    %v1238 = vunpack.c.l.b16 %v1053
    %v1239 = vunpack.c.h.b16 %v1053
    %v1240 = vunpack.c.l.b16 %v1054
    %v1241 = vunpack.c.h.b16 %v1054
    %v1242 = vunpack.c.l.b16 %v1055
    %v1243 = vunpack.c.h.b16 %v1055
    %v1244 = vunpack.c.l.b16 %v1056
    %v1245 = vunpack.c.h.b16 %v1056
    %v1246 = vunpack.c.l.b16 %v1057
    %v1247 = vunpack.c.h.b16 %v1057
    %v1248 = vunpack.c.l.b16 %v1058
    %v1249 = vunpack.c.h.b16 %v1058
    %v1250 = vunpack.c.l.b16 %v1059
    %v1251 = vunpack.c.h.b16 %v1059
    %v1252 = vunpack.c.l.b16 %v1060
    %v1253 = vunpack.c.h.b16 %v1060
    %v1254 = vunpack.c.l.b16 %v1061
    %v1255 = vunpack.c.h.b16 %v1061
    %v1256 = vunpack.c.l.b16 %v1062
    %v1257 = vunpack.c.h.b16 %v1062
    %v1258 = vunpack.c.l.b16 %v1063
    %v1259 = vunpack.c.h.b16 %v1063
    %v1260 = vunpack.c.l.b16 %v1064
    %v1261 = vunpack.c.h.b16 %v1064
    %v1262 = vunpack.c.l.b16 %v1065
    %v1263 = vunpack.c.h.b16 %v1065
    %v1264 = vunpack.c.l.b16 %v1066
    %v1265 = vunpack.c.h.b16 %v1066
    %v1266 = vunpack.c.l.b16 %v1067
    %v1267 = vunpack.c.h.b16 %v1067
    %v1268 = vunpack.c.l.b16 %v1068
    %v1269 = vunpack.c.h.b16 %v1068
    %v1270 = vunpack.c.l.b16 %v1069
    %v1271 = vunpack.c.h.b16 %v1069
    %v1272 = vunpack.c.l.b16 %v1070
    %v1273 = vunpack.c.h.b16 %v1070
    %v1274 = vunpack.c.l.b16 %v1071
    %v1275 = vunpack.c.h.b16 %v1071
    %v1276 = vpack.c.b16 %v1150, %v1148
    %v1277 = vpack.c.b16 %v1151, %v1149
    %v1278 = vpack.c.b16 %v1154, %v1152
    %v1279 = vpack.c.b16 %v1155, %v1153
    %v1280 = vpack.c.b16 %v1158, %v1156
    %v1281 = vpack.c.b16 %v1159, %v1157
    %v1282 = vpack.c.b16 %v1162, %v1160
    %v1283 = vpack.c.b16 %v1163, %v1161
    %v1284 = vpack.c.b16 %v1166, %v1164
    %v1285 = vpack.c.b16 %v1167, %v1165
    %v1286 = vpack.c.b16 %v1170, %v1168
    %v1287 = vpack.c.b16 %v1171, %v1169
    %v1288 = vpack.c.b16 %v1174, %v1172
    %v1289 = vpack.c.b16 %v1175, %v1173
    %v1290 = vpack.c.b16 %v1178, %v1176
    %v1291 = vpack.c.b16 %v1179, %v1177
    %v1292 = vpack.c.b16 %v1182, %v1180
    %v1293 = vpack.c.b16 %v1183, %v1181
    %v1294 = vpack.c.b16 %v1186, %v1184
    %v1295 = vpack.c.b16 %v1187, %v1185
    %v1296 = vpack.c.b16 %v1190, %v1188
    %v1297 = vpack.c.b16 %v1191, %v1189
    %v1298 = vpack.c.b16 %v1194, %v1192
    %v1299 = vpack.c.b16 %v1195, %v1193
    %v1300 = vpack.c.b16 %v1198, %v1196
    %v1301 = vpack.c.b16 %v1199, %v1197
    %v1302 = vpack.c.b16 %v1202, %v1200
    %v1303 = vpack.c.b16 %v1203, %v1201
    %v1304 = vpack.c.b16 %v1206, %v1204
    %v1305 = vpack.c.b16 %v1207, %v1205
    %v1306 = vpack.c.b16 %v1210, %v1208
    %v1307 = vpack.c.b16 %v1211, %v1209
    %v1308 = vpack.c.b16 %v1214, %v1212
    %v1309 = vpack.c.b16 %v1215, %v1213
    %v1310 = vpack.c.b16 %v1218, %v1216
    %v1311 = vpack.c.b16 %v1219, %v1217
    %v1312 = vpack.c.b16 %v1222, %v1220
    %v1313 = vpack.c.b16 %v1223, %v1221
    %v1314 = vpack.c.b16 %v1226, %v1224
    %v1315 = vpack.c.b16 %v1227, %v1225
    %v1316 = vpack.c.b16 %v1230, %v1228
    %v1317 = vpack.c.b16 %v1231, %v1229
    %v1318 = vpack.c.b16 %v1234, %v1232
    %v1319 = vpack.c.b16 %v1235, %v1233
    %v1320 = vpack.c.b16 %v1238, %v1236
    %v1321 = vpack.c.b16 %v1239, %v1237
    %v1322 = vpack.c.b16 %v1242, %v1240
    %v1323 = vpack.c.b16 %v1243, %v1241
    %v1324 = vpack.c.b16 %v1246, %v1244
    %v1325 = vpack.c.b16 %v1247, %v1245
    %v1326 = vpack.c.b16 %v1250, %v1248
    %v1327 = vpack.c.b16 %v1251, %v1249
    %v1328 = vpack.c.b16 %v1254, %v1252
    %v1329 = vpack.c.b16 %v1255, %v1253
    %v1330 = vpack.c.b16 %v1258, %v1256
    %v1331 = vpack.c.b16 %v1259, %v1257
    %v1332 = vpack.c.b16 %v1262, %v1260
    %v1333 = vpack.c.b16 %v1263, %v1261
    %v1334 = vpack.c.b16 %v1266, %v1264
    %v1335 = vpack.c.b16 %v1267, %v1265
    %v1336 = vpack.c.b16 %v1270, %v1268
    %v1337 = vpack.c.b16 %v1271, %v1269
    %v1338 = vpack.c.b16 %v1274, %v1272
    %v1339 = vpack.c.b16 %v1275, %v1273
    %1404 = vmatprep.subr.bf16.mxu0 %v1277
    %1405 = vmatpush1.bf16.msra.mxu0 %v1276
    %1406 = vmatprep.subr.bf16.mxu0 %v1279
    %1407 = vmatpush1.bf16.msra.mxu0 %v1278
    %1408 = vmatprep.subr.bf16.mxu0 %v1281
    %1409 = vmatpush1.bf16.msra.mxu0 %v1280
    %1410 = vmatprep.subr.bf16.mxu0 %v1283
    %1411 = vmatpush1.bf16.msra.mxu0 %v1282
    %1412 = vmatprep.subr.bf16.mxu0 %v1285
    %1413 = vmatpush1.bf16.msra.mxu0 %v1284
    %1414 = vmatprep.subr.bf16.mxu0 %v1287
    %1415 = vmatpush1.bf16.msra.mxu0 %v1286
    %1416 = vmatprep.subr.bf16.mxu0 %v1289
    %1417 = vmatpush1.bf16.msra.mxu0 %v1288
    %1418 = vmatprep.subr.bf16.mxu0 %v1291
    %1419 = vmatpush1.bf16.msra.mxu0 %v1290
    %1420 = vmatprep.subr.bf16.mxu0 %v1293
    %1421 = vmatpush1.bf16.msra.mxu0 %v1292
    %1422 = vmatprep.subr.bf16.mxu0 %v1295
    %1423 = vmatpush1.bf16.msra.mxu0 %v1294
    %1424 = vmatprep.subr.bf16.mxu0 %v1297
    %1425 = vmatpush1.bf16.msra.mxu0 %v1296
    %1426 = vmatprep.subr.bf16.mxu0 %v1299
    %1427 = vmatpush1.bf16.msra.mxu0 %v1298
    %1428 = vmatprep.subr.bf16.mxu0 %v1301
    %1429 = vmatpush1.bf16.msra.mxu0 %v1300
    %1430 = vmatprep.subr.bf16.mxu0 %v1303
    %1431 = vmatpush1.bf16.msra.mxu0 %v1302
    %1432 = vmatprep.subr.bf16.mxu0 %v1305
    %1433 = vmatpush1.bf16.msra.mxu0 %v1304
    %1434 = vmatprep.subr.bf16.mxu0 %v1307
    %1435 = vmatpush1.bf16.msra.mxu0 %v1306
    %1436 = vmatprep.mubr.bf16.mxu0 %v1005
    %1437 = vmatmul.mubr.bf16.gmra.mrb[0].mxu0 %v1004
    %v1438 = vpop.f32.mrb[0].mxu0
    %v1439 = vadd.f32 %v1077, %v1438
    %v1440 = vpop.f32.mrb[0].mxu0
    %v1441 = vadd.f32 %v1081, %v1440
    %v1442 = vpop.f32.mrb[0].mxu0
    %v1443 = vadd.f32 %v1077, %v1442
    %v1444 = vpop.f32.mrb[0].mxu0
    %v1445 = vadd.f32 %v1081, %v1444
    %1446 = vdwg.mxu0
    %1447 = vmatprep.subr.bf16.mxu0 %v1309
    %1448 = vmatpush1.bf16.msra.mxu0 %v1308
    %1449 = vmatprep.subr.bf16.mxu0 %v1311
    %1450 = vmatpush1.bf16.msra.mxu0 %v1310
    %1451 = vmatprep.subr.bf16.mxu0 %v1313
    %1452 = vmatpush1.bf16.msra.mxu0 %v1312
    %1453 = vmatprep.subr.bf16.mxu0 %v1315
    %1454 = vmatpush1.bf16.msra.mxu0 %v1314
    %1455 = vmatprep.subr.bf16.mxu0 %v1317
    %1456 = vmatpush1.bf16.msra.mxu0 %v1316
    %1457 = vmatprep.subr.bf16.mxu0 %v1319
    %1458 = vmatpush1.bf16.msra.mxu0 %v1318
    %1459 = vmatprep.subr.bf16.mxu0 %v1321
    %1460 = vmatpush1.bf16.msra.mxu0 %v1320
    %1461 = vmatprep.subr.bf16.mxu0 %v1323
    %1462 = vmatpush1.bf16.msra.mxu0 %v1322
    %1463 = vmatprep.subr.bf16.mxu0 %v1325
    %1464 = vmatpush1.bf16.msra.mxu0 %v1324
    %1465 = vmatprep.subr.bf16.mxu0 %v1327
    %1466 = vmatpush1.bf16.msra.mxu0 %v1326
    %1467 = vmatprep.subr.bf16.mxu0 %v1329
    %1468 = vmatpush1.bf16.msra.mxu0 %v1328
    %1469 = vmatprep.subr.bf16.mxu0 %v1331
    %1470 = vmatpush1.bf16.msra.mxu0 %v1330
    %1471 = vmatprep.subr.bf16.mxu0 %v1333
    %1472 = vmatpush1.bf16.msra.mxu0 %v1332
    %1473 = vmatprep.subr.bf16.mxu0 %v1335
    %1474 = vmatpush1.bf16.msra.mxu0 %v1334
    %1475 = vmatprep.subr.bf16.mxu0 %v1337
    %1476 = vmatpush1.bf16.msra.mxu0 %v1336
    %1477 = vmatprep.subr.bf16.mxu0 %v1339
    %1478 = vmatpush1.bf16.msra.mxu0 %v1338
    %1479 = vmatprep.mubr.bf16.mxu0 %v1007
    %1480 = vmatmul.mubr.bf16.gmra.mrb[0].mxu0 %v1006
    %v1481 = vpop.f32.mrb[0].mxu0
    %v1482 = vadd.f32 %v1439, %v1481
    %v1483 = vpop.f32.mrb[0].mxu0
    %v1484 = vadd.f32 %v1441, %v1483
    %v1485 = vpop.f32.mrb[0].mxu0
    %v1486 = vadd.f32 %v1443, %v1485
    %v1487 = vpop.f32.mrb[0].mxu0
    %v1488 = vadd.f32 %v1445, %v1487
    %1489 = vdwg.mxu0
    %v1490 = vmax.f32 %v1482, 0.0
    %v1491 = vmax.f32 %v1484, 0.0
    %v1492 = vmax.f32 %v1486, 0.0
    %v1493 = vmax.f32 %v1488, 0.0
    %v1494 = vpack.c.bf16 %v1492, %v1490
    %v1495 = vpack.c.bf16 %v1493, %v1491
    %v1496 = vld [vmem:[#allocation6] sm:$0xf]
    %v1497 = vld [vmem:[#allocation6 + $0x4] sm:$0xf]
    %v1498 = vld [vmem:[#allocation6 + $0x8] sm:$0xf]
    %v1499 = vld [vmem:[#allocation6 + $0xc] sm:$0xf]
    %v1500 = vld [vmem:[#allocation6 + $0x10] sm:$0xf]
    %v1501 = vld [vmem:[#allocation6 + $0x14] sm:$0xf]
    %v1502 = vld [vmem:[#allocation6 + $0x18] sm:$0xf]
    %v1503 = vld [vmem:[#allocation6 + $0x1c] sm:$0xf]
    %v1504 = vld [vmem:[#allocation6 + $0x20] sm:$0xf]
    %v1505 = vld [vmem:[#allocation6 + $0x24] sm:$0xf]
    %v1506 = vld [vmem:[#allocation6 + $0x28] sm:$0xf]
    %v1507 = vld [vmem:[#allocation6 + $0x2c] sm:$0xf]
    %v1508 = vld [vmem:[#allocation6 + $0x30] sm:$0xf]
    %v1509 = vld [vmem:[#allocation6 + $0x34] sm:$0xf]
    %v1510 = vld [vmem:[#allocation6 + $0x38] sm:$0xf]
    %v1511 = vld [vmem:[#allocation6 + $0x3c] sm:$0xf]
    %v1512 = vld [vmem:[#allocation6 + $0x40] sm:$0xf]
    %v1513 = vld [vmem:[#allocation6 + $0x44] sm:$0xf]
    %v1514 = vld [vmem:[#allocation6 + $0x48] sm:$0xf]
    %v1515 = vld [vmem:[#allocation6 + $0x4c] sm:$0xf]
    %v1516 = vld [vmem:[#allocation6 + $0x50] sm:$0xf]
    %v1517 = vld [vmem:[#allocation6 + $0x54] sm:$0xf]
    %v1518 = vld [vmem:[#allocation6 + $0x58] sm:$0xf]
    %v1519 = vld [vmem:[#allocation6 + $0x5c] sm:$0xf]
    %v1520 = vld [vmem:[#allocation6 + $0x60] sm:$0xf]
    %v1521 = vld [vmem:[#allocation6 + $0x64] sm:$0xf]
    %v1522 = vld [vmem:[#allocation6 + $0x68] sm:$0xf]
    %v1523 = vld [vmem:[#allocation6 + $0x6c] sm:$0xf]
    %v1524 = vld [vmem:[#allocation6 + $0x70] sm:$0xf]
    %v1525 = vld [vmem:[#allocation6 + $0x74] sm:$0xf]
    %v1526 = vld [vmem:[#allocation6 + $0x78] sm:$0xf]
    %v1527 = vld [vmem:[#allocation6 + $0x7c] sm:$0xf]
    %v1528 = vld [vmem:[%s6] sm:$0x1]
    %v1530 = vlaneseq
    %v1531 = vshrl.u32 %v1530, 7
    %v1532 = vsub.s32 0, %v1531
    %v1533 = vrot.slane %v1528, %v1532
    %v1567 = vunpack.c.l.b16 %v1496
    %v1568 = vunpack.c.l.b16 %v1497
    %v1569 = vunpack.c.l.b16 %v1498
    %v1570 = vunpack.c.l.b16 %v1499
    %v1571 = vunpack.c.l.b16 %v1500
    %v1572 = vunpack.c.l.b16 %v1501
    %v1573 = vunpack.c.l.b16 %v1502
    %v1574 = vunpack.c.l.b16 %v1503
    %v1575 = vunpack.c.l.b16 %v1504
    %v1576 = vunpack.c.l.b16 %v1505
    %v1577 = vunpack.c.l.b16 %v1506
    %v1578 = vunpack.c.l.b16 %v1507
    %v1579 = vunpack.c.l.b16 %v1508
    %v1580 = vunpack.c.l.b16 %v1509
    %v1581 = vunpack.c.l.b16 %v1510
    %v1582 = vunpack.c.l.b16 %v1511
    %v1583 = vunpack.c.l.b16 %v1512
    %v1584 = vunpack.c.l.b16 %v1513
    %v1585 = vunpack.c.l.b16 %v1514
    %v1586 = vunpack.c.l.b16 %v1515
    %v1587 = vunpack.c.l.b16 %v1516
    %v1588 = vunpack.c.l.b16 %v1517
    %v1589 = vunpack.c.l.b16 %v1518
    %v1590 = vunpack.c.l.b16 %v1519
    %v1591 = vunpack.c.l.b16 %v1520
    %v1592 = vunpack.c.l.b16 %v1521
    %v1593 = vunpack.c.l.b16 %v1522
    %v1594 = vunpack.c.l.b16 %v1523
    %v1595 = vunpack.c.l.b16 %v1524
    %v1596 = vunpack.c.l.b16 %v1525
    %v1597 = vunpack.c.l.b16 %v1526
    %v1598 = vunpack.c.l.b16 %v1527
    %v1599 = vpack.c.b16 %v1568, %v1567
    %v1600 = vpack.c.b16 %v1570, %v1569
    %v1601 = vpack.c.b16 %v1572, %v1571
    %v1602 = vpack.c.b16 %v1574, %v1573
    %v1603 = vpack.c.b16 %v1576, %v1575
    %v1604 = vpack.c.b16 %v1578, %v1577
    %v1605 = vpack.c.b16 %v1580, %v1579
    %v1606 = vpack.c.b16 %v1582, %v1581
    %v1607 = vpack.c.b16 %v1584, %v1583
    %v1608 = vpack.c.b16 %v1586, %v1585
    %v1609 = vpack.c.b16 %v1588, %v1587
    %v1610 = vpack.c.b16 %v1590, %v1589
    %v1611 = vpack.c.b16 %v1592, %v1591
    %v1612 = vpack.c.b16 %v1594, %v1593
    %v1613 = vpack.c.b16 %v1596, %v1595
    %v1614 = vpack.c.b16 %v1598, %v1597
    %1631 = vmatprep.subr.bf16.mxu0 0
    %1632 = vmatpush1.bf16.msra.mxu0 %v1599
    %1633 = vmatprep.subr.bf16.mxu0 0
    %1634 = vmatpush1.bf16.msra.mxu0 %v1600
    %1635 = vmatprep.subr.bf16.mxu0 0
    %1636 = vmatpush1.bf16.msra.mxu0 %v1601
    %1637 = vmatprep.subr.bf16.mxu0 0
    %1638 = vmatpush1.bf16.msra.mxu0 %v1602
    %1639 = vmatprep.subr.bf16.mxu0 0
    %1640 = vmatpush1.bf16.msra.mxu0 %v1603
    %1641 = vmatprep.subr.bf16.mxu0 0
    %1642 = vmatpush1.bf16.msra.mxu0 %v1604
    %1643 = vmatprep.subr.bf16.mxu0 0
    %1644 = vmatpush1.bf16.msra.mxu0 %v1605
    %1645 = vmatprep.subr.bf16.mxu0 0
    %1646 = vmatpush1.bf16.msra.mxu0 %v1606
    %1647 = vmatprep.subr.bf16.mxu0 0
    %1648 = vmatpush1.bf16.msra.mxu0 %v1607
    %1649 = vmatprep.subr.bf16.mxu0 0
    %1650 = vmatpush1.bf16.msra.mxu0 %v1608
    %1651 = vmatprep.subr.bf16.mxu0 0
    %1652 = vmatpush1.bf16.msra.mxu0 %v1609
    %1653 = vmatprep.subr.bf16.mxu0 0
    %1654 = vmatpush1.bf16.msra.mxu0 %v1610
    %1655 = vmatprep.subr.bf16.mxu0 0
    %1656 = vmatpush1.bf16.msra.mxu0 %v1611
    %1657 = vmatprep.subr.bf16.mxu0 0
    %1658 = vmatpush1.bf16.msra.mxu0 %v1612
    %1659 = vmatprep.subr.bf16.mxu0 0
    %1660 = vmatpush1.bf16.msra.mxu0 %v1613
    %1661 = vmatprep.subr.bf16.mxu0 0
    %1662 = vmatpush1.bf16.msra.mxu0 %v1614
    %1663 = vmatprep.mubr.bf16.mxu0 %v1495
    %1664 = vmatmul.mubr.bf16.gmra.mrb[0].mxu0 %v1494
    %v1665 = vpop.f32.mrb[0].mxu0
    %v1666 = vadd.f32 %v1533, %v1665
    %v1667 = vpop.f32.mrb[0].mxu0
    %v1668 = vpop.f32.mrb[0].mxu0
    %v1669 = vadd.f32 %v1533, %v1668
    %v1670 = vpop.f32.mrb[0].mxu0
    %1671 = vdwg.mxu0
    %v1672 = vmax.f32 %v1666, 0.0
    %v1673 = vmax.f32 %v1669, 0.0
    %v1674 = vpack.c.bf16 %v1673, %v1672
    %v1675 = vld [vmem:[%s7] sm:$0xf]
    %v1676 = vld [vmem:[%s7 + $0x4] sm:$0xf]
    %v1677 = vld [vmem:[%s7 + $0x8] sm:$0xf]
    %v1678 = vld [vmem:[%s7 + $0xc] sm:$0xf]
    %v1679 = vld [vmem:[%s7 + $0x10] sm:$0xf]
    %v1680 = vld [vmem:[%s7 + $0x14] sm:$0xf]
    %v1681 = vld [vmem:[%s7 + $0x18] sm:$0xf]
    %v1682 = vld [vmem:[%s7 + $0x1c] sm:$0xf]
    %v1683 = vld [vmem:[%s7 + $0x20] sm:$0xf]
    %v1684 = vld [vmem:[%s7 + $0x24] sm:$0xf]
    %v1685 = vld [vmem:[%s7 + $0x28] sm:$0xf]
    %v1686 = vld [vmem:[%s7 + $0x2c] sm:$0xf]
    %v1687 = vld [vmem:[%s7 + $0x30] sm:$0xf]
    %v1688 = vld [vmem:[%s7 + $0x34] sm:$0xf]
    %v1689 = vld [vmem:[%s7 + $0x38] sm:$0xf]
    %v1690 = vld [vmem:[%s7 + $0x3c] sm:$0xf]
    %v1691 = vld [vmem:[%s8] sm:$0x1]
    %v1693 = vlaneseq
    %v1694 = vshrl.u32 %v1693, 7
    %v1695 = vsub.s32 0, %v1694
    %v1696 = vrot.slane %v1691, %v1695
    %v1714 = vunpack.c.l.b16 %v1675
    %v1715 = vunpack.c.l.b16 %v1676
    %v1716 = vunpack.c.l.b16 %v1677
    %v1717 = vunpack.c.l.b16 %v1678
    %v1718 = vunpack.c.l.b16 %v1679
    %v1719 = vunpack.c.l.b16 %v1680
    %v1720 = vunpack.c.l.b16 %v1681
    %v1721 = vunpack.c.l.b16 %v1682
    %v1722 = vunpack.c.l.b16 %v1683
    %v1723 = vunpack.c.l.b16 %v1684
    %v1724 = vunpack.c.l.b16 %v1685
    %v1725 = vunpack.c.l.b16 %v1686
    %v1726 = vunpack.c.l.b16 %v1687
    %v1727 = vunpack.c.l.b16 %v1688
    %v1728 = vunpack.c.l.b16 %v1689
    %v1729 = vunpack.c.l.b16 %v1690
    %v1730 = vpack.c.b16 %v1715, %v1714
    %v1731 = vpack.c.b16 %v1717, %v1716
    %v1732 = vpack.c.b16 %v1719, %v1718
    %v1733 = vpack.c.b16 %v1721, %v1720
    %v1734 = vpack.c.b16 %v1723, %v1722
    %v1735 = vpack.c.b16 %v1725, %v1724
    %v1736 = vpack.c.b16 %v1727, %v1726
    %v1737 = vpack.c.b16 %v1729, %v1728
    %1746 = vmatprep.subr.bf16.mxu0 0
    %1747 = vmatpush1.bf16.msra.mxu0 %v1730
    %1748 = vmatprep.subr.bf16.mxu0 0
    %1749 = vmatpush1.bf16.msra.mxu0 %v1731
    %1750 = vmatprep.subr.bf16.mxu0 0
    %1751 = vmatpush1.bf16.msra.mxu0 %v1732
    %1752 = vmatprep.subr.bf16.mxu0 0
    %1753 = vmatpush1.bf16.msra.mxu0 %v1733
    %1754 = vmatprep.subr.bf16.mxu0 0
    %1755 = vmatpush1.bf16.msra.mxu0 %v1734
    %1756 = vmatprep.subr.bf16.mxu0 0
    %1757 = vmatpush1.bf16.msra.mxu0 %v1735
    %1758 = vmatprep.subr.bf16.mxu0 0
    %1759 = vmatpush1.bf16.msra.mxu0 %v1736
    %1760 = vmatprep.subr.bf16.mxu0 0
    %1761 = vmatpush1.bf16.msra.mxu0 %v1737
    %1762 = vmatprep.subr.bf16.mxu0 0
    %1763 = vmatpush1.bf16.msra.mxu0 0
    %1764 = vmatprep.subr.bf16.mxu0 0
    %1765 = vmatpush1.bf16.msra.mxu0 0
    %1766 = vmatprep.subr.bf16.mxu0 0
    %1767 = vmatpush1.bf16.msra.mxu0 0
    %1768 = vmatprep.subr.bf16.mxu0 0
    %1769 = vmatpush1.bf16.msra.mxu0 0
    %1770 = vmatprep.subr.bf16.mxu0 0
    %1771 = vmatpush1.bf16.msra.mxu0 0
    %1772 = vmatprep.subr.bf16.mxu0 0
    %1773 = vmatpush1.bf16.msra.mxu0 0
    %1774 = vmatprep.subr.bf16.mxu0 0
    %1775 = vmatpush1.bf16.msra.mxu0 0
    %1776 = vmatprep.subr.bf16.mxu0 0
    %1777 = vmatpush1.bf16.msra.mxu0 0
    %1778 = vmatprep.mubr.bf16.mxu0 0
    %1779 = vmatmul.mubr.bf16.gmra.mrb[0].mxu0 %v1674
    %v1780 = vpop.f32.mrb[0].mxu0
    %v1781 = vadd.f32 %v1696, %v1780
    %v1782 = vpop.f32.mrb[0].mxu0
    %v1783 = vpop.f32.mrb[0].mxu0
    %v1784 = vadd.f32 %v1696, %v1783
    %v1785 = vpop.f32.mrb[0].mxu0
    %1786 = vdwg.mxu0
    %v1787 = vpack.c.bf16 %v1784, %v1781
    %v1789 = vcombine.high %v1787, %v1787
    %v1791 = vunpack.c.l.s4 1966171168
    %v1792 = vunpack.c.0.s8 %v1791
    %v1793 = vlaneseq
    %v1794 = vshrl.u32 %v1793, 7
    %v1795 = vsub.s32 %v1792, %v1794
    %v1796 = vrot.slane %v1787, %v1795
    %v1798 = vunpack.c.l.s4 1966171168
    %v1799 = vunpack.c.0.s8 %v1798
    %v1800 = vlaneseq
    %v1801 = vshrl.u32 %v1800, 7
    %v1802 = vsub.s32 %v1799, %v1801
    %v1803 = vrot.slane %v1789, %v1802
    %v1804 = vcombine.high %v1796, %v1796
    %v1805 = vcombine.high %v1803, %v1803
    %v1807 = vunpack.c.l.s4 1966171168
    %v1808 = vunpack.c.0.s8 %v1807
    %v1809 = vlaneseq
    %v1810 = vshrl.u32 %v1809, 7
    %v1811 = vsub.s32 %v1808, %v1810
    %v1812 = vrot.slane %v1796, %v1811
    %v1814 = vunpack.c.l.s4 1966171168
    %v1815 = vunpack.c.0.s8 %v1814
    %v1816 = vlaneseq
    %v1817 = vshrl.u32 %v1816, 7
    %v1818 = vsub.s32 %v1815, %v1817
    %v1819 = vrot.slane %v1803, %v1818
    %v1821 = vunpack.c.l.s4 1966171168
    %v1822 = vunpack.c.0.s8 %v1821
    %v1823 = vlaneseq
    %v1824 = vshrl.u32 %v1823, 7
    %v1825 = vsub.s32 %v1822, %v1824
    %v1826 = vrot.slane %v1804, %v1825
    %v1828 = vunpack.c.l.s4 1966171168
    %v1829 = vunpack.c.0.s8 %v1828
    %v1830 = vlaneseq
    %v1831 = vshrl.u32 %v1830, 7
    %v1832 = vsub.s32 %v1829, %v1831
    %v1833 = vrot.slane %v1805, %v1832
    %v1834 = vcombine.high %v1812, %v1812
    %v1835 = vcombine.high %v1819, %v1819
    %v1836 = vcombine.high %v1826, %v1826
    %v1837 = vcombine.high %v1833, %v1833
    %1846 = vst [vmem:[#allocation7] sm:$0x1] %v1812
    %1847 = vst [vmem:[#allocation7 + $0x1] sm:$0x1] %v1826
    %1848 = vst [vmem:[#allocation7 + $0x2] sm:$0x1] %v1834
    %1849 = vst [vmem:[#allocation7 + $0x3] sm:$0x1] %v1836
    %1850 = vst [vmem:[#allocation7 + $0x4] sm:$0x1] %v1819
    %1851 = vst [vmem:[#allocation7 + $0x5] sm:$0x1] %v1833
    %1852 = vst [vmem:[#allocation7 + $0x6] sm:$0x1] %v1835
    %1853 = vst [vmem:[#allocation7 + $0x7] sm:$0x1] %v1837
    // Predicated region
    $region50: #{genre_classifier_forward.1} parent=1 // pred_check
      _
    $region51: #{genre_classifier_forward.1} parent=1 // pred_check_branch
      %1855 = sbr.rel (0) target = $region53
    $region52: #{genre_classifier_forward.1} parent=1 // pred_region
      // Predicated region
      $region54: #{genre_classifier_forward.1} parent=52 // pred_check
        _
      $region55: #{genre_classifier_forward.1} parent=52 // pred_check_branch
        %1857 = sbr.rel (0) target = $region57
      $region56: #{genre_classifier_forward.1} parent=52 // pred_region
        // Predicated region
        $region58: #{genre_classifier_forward.1} parent=56 // pred_check
          _
        $region59: #{genre_classifier_forward.1} parent=56 // pred_check_branch
          %1859 = sbr.rel target = $region61
        $region60: #{genre_classifier_forward.1} parent=56 // pred_region
          // Predicated region
          $region73: #{genre_classifier_forward.1} parent=60 // pred_check
            _
          $region74: #{genre_classifier_forward.1} parent=60 // pred_check_branch
            %1874 = sbr.rel (0) target = $region76
          $region75: #{genre_classifier_forward.1} parent=60 // pred_region
            loop: start=0, step=1, limit=1
            $region77: #{genre_classifier_forward.1} parent=75 // loop_pre_header
              _
            $region78: #{genre_classifier_forward.1} parent=75 // loop_header
              %s1877 = sphi 0, %s1881
              %p1878 = scmp.ge.s32.totalorder %s1877, 1
              %s1882 = sphi [#allocation7], [#allocation7]
              %s1883 = sphi %s9, %s9
            $region79: #{genre_classifier_forward.1} parent=75 // loop_header_branch
              %1880 = sbr.rel (%p1878) target = $region83
            $region80: #{genre_classifier_forward.1} parent=75 // loop_body
              %v1884 = vld [vmem:[%s1882] sm:$0x1]
              %1885 = vst [vmem:[%s1883] sm:$0x1] %v1884
            $region81: #{genre_classifier_forward.1} parent=75 // loop_footer
              %s1881 = sadd.s32 1, %s1877
            $region82: #{genre_classifier_forward.1} parent=75 // loop_footer_branch
              %1876 = sbr.rel target = $region78
            $region83: #{genre_classifier_forward.1} parent=75 // loop_exit
              _
          $region76: #{genre_classifier_forward.1} parent=60 // pred_fallthru
            _
        $region61: #{genre_classifier_forward.1} parent=56 // pred_fallthru
          _
        // Predicated region
        $region62: #{genre_classifier_forward.1} parent=56 // pred_check
          _
        $region63: #{genre_classifier_forward.1} parent=56 // pred_check_branch
          %1861 = sbr.rel (0) target = $region65
        $region64: #{genre_classifier_forward.1} parent=56 // pred_region
          loop: start=0, step=1, limit=1
          $region66: #{genre_classifier_forward.1} parent=64 // loop_pre_header
            _
          $region67: #{genre_classifier_forward.1} parent=64 // loop_header
            %s1864 = sphi 0, %s1868
            %p1865 = scmp.ge.s32.totalorder %s1864, 1
            %s1869 = sphi [#allocation7], [#allocation7]
            %s1870 = sphi %s9, %s9
          $region68: #{genre_classifier_forward.1} parent=64 // loop_header_branch
            %1867 = sbr.rel (%p1865) target = $region72
          $region69: #{genre_classifier_forward.1} parent=64 // loop_body
            %v1871 = vld [vmem:[%s1869] sm:$0x1]
            %1872 = vst [vmem:[%s1870] sm:$0x1] %v1871
          $region70: #{genre_classifier_forward.1} parent=64 // loop_footer
            %s1868 = sadd.s32 1, %s1864
          $region71: #{genre_classifier_forward.1} parent=64 // loop_footer_branch
            %1863 = sbr.rel target = $region67
          $region72: #{genre_classifier_forward.1} parent=64 // loop_exit
            _
        $region65: #{genre_classifier_forward.1} parent=56 // pred_fallthru
          _
      $region57: #{genre_classifier_forward.1} parent=52 // pred_fallthru
        _
      %1886 = vnop
    $region53: #{genre_classifier_forward.1} parent=1 // pred_fallthru
      _
    // Predicated region
    $region84: #{genre_classifier_forward.1} parent=1 // pred_check
      _
    $region85: #{genre_classifier_forward.1} parent=1 // pred_check_branch
      %1888 = sbr.rel (0) target = $region87
    $region86: #{genre_classifier_forward.1} parent=1 // pred_region
      _
    $region87: #{genre_classifier_forward.1} parent=1 // pred_fallthru
      _
    %1889 = vsyncpa [#allocation3], 1
    %1890 = vsyncpa [#allocation5], 1

</llo_original>
